<compile_context>
chip_gen: v6e
topology: v6e:2x2x1
jax: 0.10.0
libtpu: 0.0.40
codegen_flags: <defaults>
</compile_context>

<pallas_src>
import functools

import numpy as np
import jax
import jax.numpy as jnp
from jax.experimental import pallas as pl
from jax.experimental.pallas import tpu as pltpu

LOGZERO = -10000000000.0
ZERO = 1e-10

VW_PAD = 128  # padded word-vocab size (lane dim)
CS_PAD = 128  # padded subword-vocab size (lane dim)


# --------------------------------------------------------------------------------------
# espnet's lexical tree builder (host-side glue)
# --------------------------------------------------------------------------------------
def make_lexical_tree(word_dict, subword_dict, word_unk):
    # node = [dict(subword_id -> node), word_id, (xl, xr)]
    root = [{}, -1, None]
    for w, wid in word_dict.items():
        if wid > 0 and wid != word_unk:
            if True in [c not in subword_dict for c in w]:
                continue
            succ = root[0]
            for i, c in enumerate(w):
                cid = subword_dict[c]
                if cid not in succ:
                    succ[cid] = [{}, -1, (wid - 1, wid)]
                else:
                    prev = succ[cid][2]
                    succ[cid][2] = (min(prev[0], wid - 1), max(prev[1], wid))
                if i == len(w) - 1:
                    succ[cid][1] = wid
                succ = succ[cid][0]
    return root


# --------------------------------------------------------------------------------------
# Pallas kernels
# --------------------------------------------------------------------------------------
def _boundary_kernel(wid_ref, h_ref, ewx_ref, wh_ref, wo_ref, mask_ref, fused_ref,
                     rvalid_ref, h_out_ref, cumsum_ref, logy_ref, *,
                     word_unk, space, eos, oov_penalty):
    """Fused word-boundary / initial step (one pallas_call):

    word-LM RNN -> masked softmax -> [cumsum | lexroot children segment sums] in ONE
    (1,128)x(128,256) MXU pass -> lexroot lookahead scoring.

    At the lexroot: wids is None (sum_prob == 1), wid < 0 and xi == <space>, so the scoring
    specialization is baked in statically.
    """
    # ---- tiny word-level RNN, folded into the kernel (wid arrives as an SMEM scalar) ----
    wid = wid_ref[0]
    lane_v = jax.lax.broadcasted_iota(jnp.int32, (1, VW_PAD), 1)
    onehot = (lane_v == wid).astype(jnp.float32)                      # (1, VW_PAD)
    ex = jnp.dot(onehot, ewx_ref[...], precision=jax.lax.Precision.HIGHEST,
                 preferred_element_type=jnp.float32)                  # == (E @ Wx)[wid]
    hh = jnp.dot(h_ref[...], wh_ref[...], precision=jax.lax.Precision.HIGHEST,
                 preferred_element_type=jnp.float32)
    h = jnp.tanh(ex + hh)                                             # (1, H)
    h_out_ref[...] = h
    z = jnp.dot(h, wo_ref[...], precision=jax.lax.Precision.HIGHEST,
                preferred_element_type=jnp.float32)                   # (1, VW_PAD)

    # ---- masked softmax over the real word vocabulary ----
    mask = mask_ref[...]
    zm = jnp.where(mask > 0, z, -1e30)
    m = jnp.max(zm, axis=-1, keepdims=True)
    e = jnp.exp(zm - m) * mask
    p = e / jnp.sum(e, axis=-1, keepdims=True)

    # ---- one MXU pass producing both the cumsum (state) and the root-child probs ----
    cs_child = jnp.dot(p, fused_ref[...], precision=jax.lax.Precision.HIGHEST,
                       preferred_element_type=jnp.float32)            # (1, VW_PAD + CS_PAD)
    cs = cs_child[:, :VW_PAD]
    child = cs_child[:, VW_PAD:]
    cumsum_ref[...] = cs

    # ---- lexroot lookahead scoring ----
    unk_prob = p[:, word_unk:word_unk + 1]          # exact segment: cs[unk] - cs[unk-1]
    y = jnp.where(rvalid_ref[...] > 0, child, unk_prob * oov_penalty)  # sum_prob == 1
    lane_c = jax.lax.broadcasted_iota(jnp.int32, (1, CS_PAD), 1)
    se = jnp.logical_or(lane_c == space, lane_c == eos)
    y = jnp.where(se, ZERO, y)                      # root wid < 0, xi == <space>
    logy_ref[...] = jnp.log(jnp.maximum(y, ZERO))


def _descend_kernel(flags_ref, cs_s_ref, cs_ref, sel_ref, valid_ref, logy_ref, *,
                    word_unk, space, eos, oov_penalty):
    """Tree-descend step: lookahead scoring from the stored cumulative word probabilities.

    flags (SMEM int32): [has_wids, wid_ge_0, xl, xr, wid_clamped].
    cs_s_ref is the same cumsum fed through SMEM -> scalar picks use scalar slots only.
    sel_ref / valid_ref are the per-node cached selection matrix / valid vector.
    """
    has_wids = flags_ref[0]
    wid_ge_0 = flags_ref[1]
    xl = flags_ref[2]
    xr = flags_ref[3]
    wid = jnp.maximum(flags_ref[4], 1)   # host already clamps; extra guard keeps wid-1 >= 0

    # scalar SMEM picks (no iota/mask builds, no cross-lane reductions)
    sum_prob = jnp.where(has_wids == 1, cs_s_ref[0, xr] - cs_s_ref[0, xl], 1.0)
    inv_sum = 1.0 / jnp.maximum(sum_prob, ZERO)
    unk_prob = cs_s_ref[0, word_unk] - cs_s_ref[0, word_unk - 1]
    wlm_prob = (cs_s_ref[0, wid] - cs_s_ref[0, wid - 1]) * inv_sum

    # child[cid] = cs[hi] - cs[lo] via the cached +/-1 selection matrix (one MXU pass)
    child = jnp.dot(cs_ref[...], sel_ref[...], precision=jax.lax.Precision.HIGHEST,
                    preferred_element_type=jnp.float32)               # (1, CS_PAD)
    y = jnp.where(valid_ref[...] > 0, child * inv_sum, unk_prob * oov_penalty)

    # wid >= 0 override: y[<space>] = y[<eos>] = p(wid) / sum_prob
    lane_c = jax.lax.broadcasted_iota(jnp.int32, (1, CS_PAD), 1)
    se = jnp.logical_or(lane_c == space, lane_c == eos)
    y = jnp.where(jnp.logical_and(se, wid_ge_0 == 1), wlm_prob, y)

    log_y = jnp.log(jnp.maximum(y, ZERO))
    # early "sum_prob < zero" branch folded in as a full-row logzero fill
    logy_ref[...] = jnp.where(sum_prob < ZERO, LOGZERO, log_y)


# --------------------------------------------------------------------------------------
# Synthetic word-level LM (deterministic) — parameters shared by Pallas path & reference
# --------------------------------------------------------------------------------------
def make_wordlm_params(key, n_vocab, emb=16, hidden=32):
    k1, k2, k3, k4 = jax.random.split(key, 4)
    E = np.asarray(jax.random.normal(k1, (n_vocab, emb), jnp.float32)) * 0.5
    Wx = np.asarray(jax.random.normal(k2, (emb, hidden), jnp.float32)) * 0.3
    Wh = np.asarray(jax.random.normal(k3, (hidden, hidden), jnp.float32)) * 0.3
    Wo = np.asarray(jax.random.normal(k4, (hidden, n_vocab), jnp.float32)) * 0.5
    return dict(E=E.astype(np.float32), Wx=Wx.astype(np.float32),
                Wh=Wh.astype(np.float32), Wo=Wo.astype(np.float32))


def make_wordlm_np(params):
    """Numpy reference of the same simple RNN: h = tanh((E@Wx)[wid] + h_prev @ Wh); z = h @ Wo."""
    EWx = (params['E'] @ params['Wx']).astype(np.float32)
    Wh = params['Wh']
    Wo = params['Wo']
    hidden = Wh.shape[0]

    def wordlm(state, wid):
        h_prev = state if state is not None else np.zeros((hidden,), np.float32)
        h = np.tanh(EWx[int(wid)] + h_prev @ Wh).astype(np.float32)
        z = (h @ Wo)[None, :].astype(np.float32)
        return h, z

    return wordlm


# --------------------------------------------------------------------------------------
# LookAheadWordLM with Pallas hot path
# --------------------------------------------------------------------------------------
class LookAheadWordLMPallas:
    logzero = LOGZERO
    zero = ZERO

    def __init__(self, wordlm_params, word_dict, subword_dict,
                 oov_penalty=0.0001, open_vocab=True):
        self.word_eos = word_dict['<eos>']
        self.word_unk = word_dict['<unk>']
        self.var_word_eos = self.word_eos
        self.var_word_unk = self.word_unk
        self.space = subword_dict['<space>']
        self.eos = subword_dict['<eos>']
        self.lexroot = make_lexical_tree(word_dict, subword_dict, self.word_unk)
        self.oov_penalty = oov_penalty
        self.open_vocab = open_vocab
        self.subword_dict_size = len(subword_dict)
        self.word_dict_size = len(word_dict)
        self.normalized = True

        assert self.word_dict_size <= VW_PAD, "word vocab larger than VW_PAD"
        assert self.subword_dict_size <= CS_PAD, "subword vocab larger than CS_PAD"
        assert self.word_unk >= 1, "kernel assumes word_unk >= 1 (uses index word_unk-1)"

        nw = self.word_dict_size
        ns = self.subword_dict_size

        # ---- constants built exactly once and kept on device (no per-step H2D) ----
        E, Wx, Wh, Wo = (wordlm_params['E'], wordlm_params['Wx'],
                         wordlm_params['Wh'], wordlm_params['Wo'])
        hidden = Wh.shape[0]
        assert E.shape[0] == nw and Wo.shape[1] == nw

        ewx_pad = np.zeros((VW_PAD, hidden), np.float32)
        ewx_pad[:nw] = (E @ Wx).astype(np.float32)          # fold embedding @ Wx once
        wo_pad = np.zeros((hidden, VW_PAD), np.float32)
        wo_pad[:, :nw] = Wo

        vocab_mask = np.zeros((1, VW_PAD), np.float32)
        vocab_mask[0, :nw] = 1.0

        # fused [tri | root_range]: one MXU pass gives cumsum AND root-children segment sums
        tri = np.triu(np.ones((VW_PAD, VW_PAD), np.float32))   # tri[j,i]=1 iff j<=i
        root_range = np.zeros((VW_PAD, CS_PAD), np.float32)
        root_valid = np.zeros((1, CS_PAD), np.float32)
        for cid, nd in self.lexroot[0].items():
            lo, hi = nd[2]
            assert lo < hi, "degenerate (lo,hi) range in lexroot"
            root_range[lo + 1:hi + 1, cid] = 1.0                # sum_{j in (lo, hi]} p[j]
            root_valid[0, cid] = 1.0
        fused = np.concatenate([tri, root_range], axis=1)       # (VW_PAD, VW_PAD + CS_PAD)

        ewx_d = jnp.asarray(ewx_pad)
        wh_d = jnp.asarray(Wh.astype(np.float32))
        wo_d = jnp.asarray(wo_pad)
        mask_d = jnp.asarray(vocab_mask)
        fused_d = jnp.asarray(fused)
        rvalid_d = jnp.asarray(root_valid)

        self._node_cache = {}   # id(node) -> (flags, sel, valid) device arrays, reused forever

        smem = pltpu.MemorySpace.SMEM
        vmem = pltpu.MemorySpace.VMEM

        boundary_call = pl.pallas_call(
            functools.partial(_boundary_kernel, word_unk=self.word_unk,
                              space=self.space, eos=self.eos,
                              oov_penalty=float(oov_penalty)),
            out_shape=(jax.ShapeDtypeStruct((1, hidden), jnp.float32),   # new word-LM state
                       jax.ShapeDtypeStruct((1, VW_PAD), jnp.float32),   # cumulative probs
                       jax.ShapeDtypeStruct((1, CS_PAD), jnp.float32)),  # log_y
            in_specs=[pl.BlockSpec(memory_space=smem),    # wid (scalar)
                      pl.BlockSpec(memory_space=vmem),    # h_prev
                      pl.BlockSpec(memory_space=vmem),    # E @ Wx  (padded)
                      pl.BlockSpec(memory_space=vmem),    # Wh
                      pl.BlockSpec(memory_space=vmem),    # Wo      (padded)
                      pl.BlockSpec(memory_space=vmem),    # vocab mask
                      pl.BlockSpec(memory_space=vmem),    # [tri | root_range]
                      pl.BlockSpec(memory_space=vmem)],   # root valid
            out_specs=(pl.BlockSpec(memory_space=vmem),
                       pl.BlockSpec(memory_space=vmem),
                       pl.BlockSpec(memory_space=vmem)),
        )

        descend_call = pl.pallas_call(
            functools.partial(_descend_kernel, word_unk=self.word_unk,
                              space=self.space, eos=self.eos,
                              oov_penalty=float(oov_penalty)),
            out_shape=jax.ShapeDtypeStruct((1, CS_PAD), jnp.float32),
            in_specs=[pl.BlockSpec(memory_space=smem),    # flags
                      pl.BlockSpec(memory_space=smem),    # cumsum (scalar picks)
                      pl.BlockSpec(memory_space=vmem),    # cumsum (MXU operand)
                      pl.BlockSpec(memory_space=vmem),    # per-node +/-1 selection matrix
                      pl.BlockSpec(memory_space=vmem)],   # per-node valid vector
            out_specs=pl.BlockSpec(memory_space=vmem),
        )

        def word_step(h_prev, wid):
            # one jit / one pallas_call: word-LM RNN + softmax + cumsum + root lookahead
            wid_v = jnp.reshape(jnp.asarray(wid, jnp.int32), (1,))
            h_new, cumsum, logy = boundary_call(wid_v, h_prev, ewx_d, wh_d, wo_d,
                                                mask_d, fused_d, rvalid_d)
            return h_new, cumsum, logy[:, :ns]

        def descend_step(cumsum, flags, sel, valid):
            # cumsum fed twice: once to SMEM (scalar picks), once to VMEM (MXU operand)
            return descend_call(flags, cumsum, cumsum, sel, valid)[:, :ns]

        self._word_step = jax.jit(word_step)
        self._descend_step = jax.jit(descend_step)

        self._h0 = jnp.zeros((1, hidden), jnp.float32)
        self._zeros_logy = jnp.zeros((1, ns), jnp.float32)
        self._logzero_logy = jnp.full((1, ns), LOGZERO, jnp.float32)

    def _node_data(self, node):
        key = id(node)
        cached = self._node_cache.get(key)
        if cached is None:
            succ, wid, wids = node
            flags = np.zeros((8,), np.int32)
            flags[0] = 1 if wids is not None else 0
            flags[1] = 1 if wid >= 0 else 0
            if wids is not None:
                flags[2], flags[3] = wids[0], wids[1]
            flags[4] = wid if wid >= 1 else 1    # clamped so wid-1 stays in range (masked out)
            sel = np.zeros((VW_PAD, CS_PAD), np.float32)
            valid = np.zeros((1, CS_PAD), np.float32)
            for cid, nd in succ.items():
                lo, hi = nd[2]
                assert lo < hi, "degenerate (lo,hi) range in lexical tree"
                sel[hi, cid] = 1.0
                sel[lo, cid] = -1.0
                valid[0, cid] = 1.0
            cached = (jnp.asarray(flags), jnp.asarray(sel), jnp.asarray(valid))
            self._node_cache[key] = cached
        return cached

    def forward(self, state, x):
        if state is None:
            # NOTE: mirrors the upstream code, which overwrites var_word_unk with
            # var_word_eos in this branch (kept for exact semantic reproduction).
            self.var_word_unk = self.var_word_eos
            wlm_state, cumsum_probs, log_y = self._word_step(self._h0, self.var_word_eos)
            return ((wlm_state, cumsum_probs, self.lexroot), log_y)

        wlm_state, cumsum_probs, node = state
        xi = int(x)
        if xi == self.space:                        # word boundary: advance the word LM
            if node is not None and node[1] >= 0:
                w = node[1]
            else:
                w = self.var_word_unk
            wlm_state, cumsum_probs, log_y = self._word_step(wlm_state, w)
            return ((wlm_state, cumsum_probs, self.lexroot), log_y)
        if node is not None and xi in node[0]:      # descend the lexical tree
            new_node = node[0][xi]
            flags, sel, valid = self._node_data(new_node)
            log_y = self._descend_step(cumsum_probs, flags, sel, valid)
            return ((wlm_state, cumsum_probs, new_node), log_y)
        if self.open_vocab:                         # OOV prefix
            return ((wlm_state, cumsum_probs, None), self._zeros_logy)
        return ((wlm_state, None, None), self._logzero_logy)

    # TODO(synk): `final()` (log-softmax over word logits at <eos>) not kernelized; only the
    #             forward pass is required here.


# --------------------------------------------------------------------------------------
# Pure numpy reference mirroring the PyTorch forward semantics (for verification)
# --------------------------------------------------------------------------------------
class LookAheadWordLMRef:
    def __init__(self, wordlm, word_dict, subword_dict, oov_penalty=0.0001, open_vocab=True):
        self.wordlm = wordlm
        self.word_eos = word_dict['<eos>']
        self.word_unk = word_dict['<unk>']
        self.var_word_eos = self.word_eos
        self.var_word_unk = self.word_unk
        self.space = subword_dict['<space>']
        self.eos = subword_dict['<eos>']
        self.lexroot = make_lexical_tree(word_dict, subword_dict, self.word_unk)
        self.oov_penalty = oov_penalty
        self.open_vocab = open_vocab
        self.subword_dict_size = len(subword_dict)

    def _cumsum(self, wlm_state, wid):
        wlm_state, z = self.wordlm(wlm_state, wid)
        z = np.asarray(z, np.float32)
        z = z - z.max(axis=1, keepdims=True)
        p = np.exp(z)
        p = p / p.sum(axis=1, keepdims=True)
        return wlm_state, np.cumsum(p, axis=1, dtype=np.float32)

    def forward(self, state, x):
        if state is None:
            self.var_word_unk = self.var_word_eos  # mirror upstream quirk
            wlm_state, cumsum_probs = self._cumsum(None, self.var_word_eos)
            new_node = self.lexroot
            xi = self.space
        else:
            wlm_state, cumsum_probs, node = state
            xi = int(x)
            if xi == self.space:
                if node is not None and node[1] >= 0:
                    w = node[1]
                else:
                    w = self.var_word_unk
                wlm_state, cumsum_probs = self._cumsum(wlm_state, w)
                new_node = self.lexroot
            elif node is not None and xi in node[0]:
                new_node = node[0][xi]
            elif self.open_vocab:
                new_node = None
            else:
                return ((wlm_state, None, None),
                        np.full((1, self.subword_dict_size), LOGZERO, np.float32))
        if new_node is not None:
            succ, wid, wids = new_node
            if wids is not None:
                sum_prob = float(cumsum_probs[0, wids[1]] - cumsum_probs[0, wids[0]])
            else:
                sum_prob = 1.0
            if sum_prob < ZERO:
                return ((wlm_state, cumsum_probs, new_node),
                        np.full((1, self.subword_dict_size), LOGZERO, np.float32))
            unk_prob = float(cumsum_probs[0, self.word_unk] - cumsum_probs[0, self.word_unk - 1])
            y = np.full((1, self.subword_dict_size), unk_prob * self.oov_penalty, np.float32)
            for cid, nd in succ.items():
                y[0, cid] = (cumsum_probs[0, nd[2][1]] - cumsum_probs[0, nd[2][0]]) / sum_prob
            if wid >= 0:
                wlm_prob = (cumsum_probs[0, wid] - cumsum_probs[0, wid - 1]) / sum_prob
                y[0, self.space] = wlm_prob
                y[0, self.eos] = wlm_prob
            elif xi == self.space:
                y[0, self.space] = ZERO
                y[0, self.eos] = ZERO
            log_y = np.log(np.maximum(y, ZERO))
        else:
            log_y = np.zeros((1, self.subword_dict_size), np.float32)
        return ((wlm_state, cumsum_probs, new_node), log_y)


# --------------------------------------------------------------------------------------
if __name__ == "__main__":
    key = jax.random.PRNGKey(0)

    # tiny deterministic dictionaries
    word_dict = {
        '<blank>': 0, '<unk>': 1, '<eos>': 2,
        'ab': 3, 'abc': 4, 'abd': 5, 'ace': 6,
        'bad': 7, 'be': 8, 'cab': 9, 'cd': 10, 'dead': 11,
    }
    subword_dict = {'<blank>': 0, '<space>': 1, '<eos>': 2,
                    'a': 3, 'b': 4, 'c': 5, 'd': 6, 'e': 7}

    params = make_wordlm_params(key, len(word_dict), emb=16, hidden=32)
    wordlm_np = make_wordlm_np(params)

    lm = LookAheadWordLMPallas(params, word_dict, subword_dict)
    ref = LookAheadWordLMRef(wordlm_np, word_dict, subword_dict)

    # drive a subword sequence through both implementations
    seq = [3, 4, 1, 5, 3, 4, 1, 7, 1, 6, 7, 2]   # a b _ c a b _ e _ d e <eos>

    state, ly = lm.forward(None, jnp.int32(lm.space))
    state_r, ly_r = ref.forward(None, lm.space)
    ly = jax.block_until_ready(ly)
    np.testing.assert_allclose(np.asarray(ly), ly_r, rtol=2e-3, atol=2e-3)

    last = ly
    for x in seq:
        state, ly = lm.forward(state, x)
        state_r, ly_r = ref.forward(state_r, x)
        ly = jax.block_until_ready(ly)
        assert ly.shape == (1, len(subword_dict))
        np.testing.assert_allclose(np.asarray(ly), ly_r, rtol=2e-3, atol=2e-3)
        last = ly

    jax.block_until_ready(last)
    print("KERNEL_OK")
</pallas_src>

<mosaic_0001>
module attributes {stable_mosaic.version = 11 : i64} {
  func.func @_boundary_kernel(%arg0: memref<1xi32, #tpu.memory_space<smem>>, %arg1: memref<1x32xf32, #tpu.memory_space<vmem>>, %arg2: memref<128x32xf32, #tpu.memory_space<vmem>>, %arg3: memref<32x32xf32, #tpu.memory_space<vmem>>, %arg4: memref<32x128xf32, #tpu.memory_space<vmem>>, %arg5: memref<1x128xf32, #tpu.memory_space<vmem>>, %arg6: memref<128x256xf32, #tpu.memory_space<vmem>>, %arg7: memref<1x128xf32, #tpu.memory_space<vmem>>, %arg8: memref<1x32xf32, #tpu.memory_space<vmem>>, %arg9: memref<1x128xf32, #tpu.memory_space<vmem>>, %arg10: memref<1x128xf32, #tpu.memory_space<vmem>>) attributes {dimension_semantics = [], scalar_prefetch = 0 : i64, scratch_operands = 0 : i64, tpu.core_type = #tpu.core_type<tc>} {
    %c0 = arith.constant 0 : index
    %0 = memref.load %arg0[%c0] : memref<1xi32, #tpu.memory_space<smem>>
    %1 = tpu.iota {dimensions = array<i32: 1>} : vector<1x128xi32>
    %2 = vector.broadcast %0 : i32 to vector<1x128xi32>
    %3 = arith.cmpi eq, %1, %2 : vector<1x128xi32>
    %4 = arith.extui %3 : vector<1x128xi1> to vector<1x128xi32>
    %5 = arith.sitofp %4 : vector<1x128xi32> to vector<1x128xf32>
    %c0_0 = arith.constant 0 : index
    %c0_1 = arith.constant 0 : index
    %6 = vector.load %arg2[%c0_0, %c0_1] : memref<128x32xf32, #tpu.memory_space<vmem>>, vector<128x32xf32>
    %cst = arith.constant dense<0.000000e+00> : vector<1x32xf32>
    %7 = tpu.matmul %5, %6, %cst {dimension_numbers = #tpu.dot_dimension_numbers<[1], [0], [0], [1], [0, 0, 1, 1], [], []>, precision = #tpu.contract_precision<fp32>} : vector<1x128xf32>, vector<128x32xf32>, vector<1x32xf32> -> vector<1x32xf32>
    %c0_2 = arith.constant 0 : index
    %c0_3 = arith.constant 0 : index
    %8 = vector.load %arg1[%c0_2, %c0_3] : memref<1x32xf32, #tpu.memory_space<vmem>>, vector<1x32xf32>
    %c0_4 = arith.constant 0 : index
    %c0_5 = arith.constant 0 : index
    %9 = vector.load %arg3[%c0_4, %c0_5] : memref<32x32xf32, #tpu.memory_space<vmem>>, vector<32x32xf32>
    %cst_6 = arith.constant dense<0.000000e+00> : vector<1x32xf32>
    %10 = tpu.matmul %8, %9, %cst_6 {dimension_numbers = #tpu.dot_dimension_numbers<[1], [0], [0], [1], [0, 0, 1, 1], [], []>, precision = #tpu.contract_precision<fp32>} : vector<1x32xf32>, vector<32x32xf32>, vector<1x32xf32> -> vector<1x32xf32>
    %11 = arith.addf %7, %10 : vector<1x32xf32>
    %12 = math.tanh %11 : vector<1x32xf32>
    %c0_7 = arith.constant 0 : index
    %c0_8 = arith.constant 0 : index
    %13 = vector.load %arg8[%c0_7, %c0_8] : memref<1x32xf32, #tpu.memory_space<vmem>>, vector<1x32xf32>
    tpu.vector_store %arg8[%c0_7, %c0_8], %12 {strides = array<i32>} : memref<1x32xf32, #tpu.memory_space<vmem>>, vector<1x32xf32>,
    %c0_9 = arith.constant 0 : index
    %c0_10 = arith.constant 0 : index
    %14 = vector.load %arg4[%c0_9, %c0_10] : memref<32x128xf32, #tpu.memory_space<vmem>>, vector<32x128xf32>
    %cst_11 = arith.constant dense<0.000000e+00> : vector<1x128xf32>
    %15 = tpu.matmul %12, %14, %cst_11 {dimension_numbers = #tpu.dot_dimension_numbers<[1], [0], [0], [1], [0, 0, 1, 1], [], []>, precision = #tpu.contract_precision<fp32>} : vector<1x32xf32>, vector<32x128xf32>, vector<1x128xf32> -> vector<1x128xf32>
    %c0_12 = arith.constant 0 : index
    %c0_13 = arith.constant 0 : index
    %16 = vector.load %arg5[%c0_12, %c0_13] : memref<1x128xf32, #tpu.memory_space<vmem>>, vector<1x128xf32>
    %cst_14 = arith.constant 0.000000e+00 : f32
    %17 = vector.broadcast %cst_14 : f32 to vector<1x128xf32>
    %18 = arith.cmpf ogt, %16, %17 : vector<1x128xf32>
    %cst_15 = arith.constant -1.000000e+30 : f32
    %19 = vector.broadcast %cst_15 : f32 to vector<1x128xf32>
    %20 = arith.select %18, %15, %19 : vector<1x128xi1>, vector<1x128xf32>
    %cst_16 = arith.constant dense<0xFF800000> : vector<1xf32>
    %21 = vector.multi_reduction <maximumf>, %20, %cst_16 [1] : vector<1x128xf32> to vector<1xf32>
    %22 = vector.shape_cast %21 : vector<1xf32> to vector<1x1xf32>
    %23 = vector.broadcast %22 : vector<1x1xf32> to vector<1x128xf32>
    %24 = arith.subf %20, %23 : vector<1x128xf32>
    %25 = math.exp %24 : vector<1x128xf32>
    %26 = arith.mulf %25, %16 : vector<1x128xf32>
    %cst_17 = arith.constant dense<0.000000e+00> : vector<1xf32>
    %27 = vector.multi_reduction <add>, %26, %cst_17 [1] : vector<1x128xf32> to vector<1xf32>
    %28 = vector.shape_cast %27 : vector<1xf32> to vector<1x1xf32>
    %29 = vector.broadcast %28 : vector<1x1xf32> to vector<1x128xf32>
    %30 = arith.divf %26, %29 : vector<1x128xf32>
    %c0_18 = arith.constant 0 : index
    %c0_19 = arith.constant 0 : index
    %31 = vector.load %arg6[%c0_18, %c0_19] : memref<128x256xf32, #tpu.memory_space<vmem>>, vector<128x256xf32>
    %cst_20 = arith.constant dense<0.000000e+00> : vector<1x256xf32>
    %32 = tpu.matmul %30, %31, %cst_20 {dimension_numbers = #tpu.dot_dimension_numbers<[1], [0], [0], [1], [0, 0, 1, 1], [], []>, precision = #tpu.contract_precision<fp32>} : vector<1x128xf32>, vector<128x256xf32>, vector<1x256xf32> -> vector<1x256xf32>
    %33 = vector.extract_strided_slice %32 {offsets = [0, 0], sizes = [1, 128], strides = [1, 1]} : vector<1x256xf32> to vector<1x128xf32>
    %34 = vector.extract_strided_slice %32 {offsets = [0, 128], sizes = [1, 128], strides = [1, 1]} : vector<1x256xf32> to vector<1x128xf32>
    %c0_21 = arith.constant 0 : index
    %c0_22 = arith.constant 0 : index
    %35 = vector.load %arg9[%c0_21, %c0_22] : memref<1x128xf32, #tpu.memory_space<vmem>>, vector<1x128xf32>
    tpu.vector_store %arg9[%c0_21, %c0_22], %33 {strides = array<i32>} : memref<1x128xf32, #tpu.memory_space<vmem>>, vector<1x128xf32>,
    %36 = vector.extract_strided_slice %30 {offsets = [0, 1], sizes = [1, 1], strides = [1, 1]} : vector<1x128xf32> to vector<1x1xf32>
    %c0_23 = arith.constant 0 : index
    %c0_24 = arith.constant 0 : index
    %37 = vector.load %arg7[%c0_23, %c0_24] : memref<1x128xf32, #tpu.memory_space<vmem>>, vector<1x128xf32>
    %cst_25 = arith.constant 0.000000e+00 : f32
    %38 = vector.broadcast %cst_25 : f32 to vector<1x128xf32>
    %39 = arith.cmpf ogt, %37, %38 : vector<1x128xf32>
    %cst_26 = arith.constant 9.99999974E-5 : f32
    %40 = vector.broadcast %cst_26 : f32 to vector<1x1xf32>
    %41 = arith.mulf %36, %40 : vector<1x1xf32>
    %42 = vector.shape_cast %41 : vector<1x1xf32> to vector<1x1xf32>
    %43 = vector.broadcast %42 : vector<1x1xf32> to vector<1x128xf32>
    %44 = arith.select %39, %34, %43 : vector<1x128xi1>, vector<1x128xf32>
    %45 = tpu.iota {dimensions = array<i32: 1>} : vector<1x128xi32>
    %c1_i32 = arith.constant 1 : i32
    %46 = vector.broadcast %c1_i32 : i32 to vector<1x128xi32>
    %47 = arith.cmpi eq, %45, %46 : vector<1x128xi32>
    %c2_i32 = arith.constant 2 : i32
    %48 = vector.broadcast %c2_i32 : i32 to vector<1x128xi32>
    %49 = arith.cmpi eq, %45, %48 : vector<1x128xi32>
    %50 = arith.ori %47, %49 : vector<1x128xi1>
    %cst_27 = arith.constant 1.000000e-10 : f32
    %51 = vector.broadcast %cst_27 : f32 to vector<1x128xf32>
    %52 = arith.select %50, %51, %44 : vector<1x128xi1>, vector<1x128xf32>
    %cst_28 = arith.constant 1.000000e-10 : f32
    %53 = vector.broadcast %cst_28 : f32 to vector<1x128xf32>
    %54 = arith.maximumf %52, %53 : vector<1x128xf32>
    %55 = math.log %54 : vector<1x128xf32>
    %c0_29 = arith.constant 0 : index
    %c0_30 = arith.constant 0 : index
    %56 = vector.load %arg10[%c0_29, %c0_30] : memref<1x128xf32, #tpu.memory_space<vmem>>, vector<1x128xf32>
    tpu.vector_store %arg10[%c0_29, %c0_30], %55 {strides = array<i32>} : memref<1x128xf32, #tpu.memory_space<vmem>>, vector<1x128xf32>,
    return
  }
}

</mosaic_0001>

<llo_original>
// kernel: word_step.1
$region0: #{word_step.1}
  #allocation0 [shape = 'u32[]', space=smem, size = 0x4, offset = 0x4, fixed_abs, tag = 'smem constant byte address 0x4 - core index']
  #allocation1 [shape = 'u32[144,128]{1,0:T(1,128)}', space=vmem, size = 0x12000, scoped, tag = 'internal scratch']
  #allocation2 [shape = 's32[1]{0:T(128)S(6)}', space=smem, size = 0x200, scoped, tag = 'scoped memory for word_step.1']
  %s0 = inlined_call_operand.<no memory space> [shape: s32[1], index: 0, kind: input, shape index: {}]
  %s1 = inlined_call_operand.vmem [shape: f32[1,32], index: 1, kind: input, shape index: {}]
  %s2 = inlined_call_operand.hbm [shape: f32[128,32], index: 2, kind: input, shape index: {}]
  %s3 = inlined_call_operand.hbm [shape: f32[32,32], index: 3, kind: input, shape index: {}]
  %s4 = inlined_call_operand.hbm [shape: f32[32,128], index: 4, kind: input, shape index: {}]
  %s5 = inlined_call_operand.vmem [shape: f32[1,128], index: 5, kind: input, shape index: {}]
  %s6 = inlined_call_operand.hbm [shape: f32[128,256], index: 6, kind: input, shape index: {}]
  %s7 = inlined_call_operand.vmem [shape: f32[1,128], index: 7, kind: input, shape index: {}]
  %s8 = inlined_call_operand.hbm [shape: f32[1,32], index: 8, kind: output, shape index: {0}]
  %s9 = inlined_call_operand.hbm [shape: f32[1,128], index: 9, kind: output, shape index: {1}]
  %s10 = inlined_call_operand.hbm [shape: f32[1,128], index: 10, kind: output, shape index: {2}]
  %11 = xla_tuple %s8, %s9, %s10
  %s12 = sld [smem:[#allocation0]]
  $region74: #{word_step.1} parent=0
    _
  %s14 = ssub.s32 1, %s12
  %s15 = scalar_select 0, %s14, %s12
  %16 = sst [smem:[#allocation2]] %s0
  $region1: #{word_step.1} parent=0
    #allocation3 [shape = 'u8[65536]{0}', space=vmem, size = 0x10000, scoped, tag = 'input window, operand 2, single buffered']
    #allocation4 [shape = 's32[1]{0}', space=sflag, size = 0x4, scoped, tag = 'scoped memory for word_step.1']
    #allocation5 [shape = 's32[1]{0}', space=sflag, size = 0x4, scoped, tag = 'scoped memory for word_step.1']
    #allocation6 [shape = 'u8[16384]{0}', space=vmem, size = 0x4000, scoped, tag = 'input window, operand 3, single buffered']
    #allocation7 [shape = 's32[1]{0}', space=sflag, size = 0x4, scoped, tag = 'scoped memory for word_step.1']
    #allocation8 [shape = 'u8[16384]{0}', space=vmem, size = 0x4000, scoped, tag = 'input window, operand 4, single buffered']
    #allocation9 [shape = 'u8[131072]{0}', space=vmem, size = 0x20000, scoped, tag = 'input window, operand 6, single buffered']
    #allocation10 [shape = 's32[1]{0}', space=sflag, size = 0x4, scoped, tag = 'scoped memory for word_step.1']
    #allocation11 [shape = 'u8[512]{0}', space=vmem, size = 0x400, scoped, tag = 'output window, operand 0, single buffered']
    #allocation12 [shape = 'u8[512]{0}', space=vmem, size = 0x400, scoped, tag = 'output window, operand 1, single buffered']
    #allocation13 [shape = 's32[1]{0}', space=sflag, size = 0x4, scoped, tag = 'scoped memory for word_step.1']
    #allocation14 [shape = 'u8[512]{0}', space=vmem, size = 0x400, scoped, tag = 'output window, operand 2, single buffered']
    %17 = vsyncpa [#allocation4], 0
    %18 = vsyncpa [#allocation7], 0
    %19 = vsyncpa [#allocation10], 0
    %20 = vsyncpa [#allocation5], 0
    %21 = vsyncpa [#allocation13], 0
    // Predicated region
    $region2: #{word_step.1} parent=1 // pred_check
      _
    $region3: #{word_step.1} parent=1 // pred_check_branch
      %23 = sbr.rel (0) target = $region5
    $region4: #{word_step.1} parent=1 // pred_region
      _
    $region5: #{word_step.1} parent=1 // pred_fallthru
      _
    // Predicated region
    $region6: #{word_step.1} parent=1 // pred_check
      _
    $region7: #{word_step.1} parent=1 // pred_check_branch
      %25 = sbr.rel (0) target = $region9
    $region8: #{word_step.1} parent=1 // pred_region
      _
    $region9: #{word_step.1} parent=1 // pred_fallthru
      _
    // Predicated region
    $region10: #{word_step.1} parent=1 // pred_check
      _
    $region11: #{word_step.1} parent=1 // pred_check_branch
      %27 = sbr.rel (0) target = $region13
    $region12: #{word_step.1} parent=1 // pred_region
      %s29 = ssub.s32 2048, 2048
      %30 = vsyncadd [#allocation4], %s29
      %s31 = sshll.u32 [#allocation3], 4
      %s32 = int_to_ptr.vmem [resolvable:$true] %s31
      %37 = dma.hbm_to_vmem [thread:$0]  %s2, 2048, %s32, [#allocation4], 128, 128, 8
    $region13: #{word_step.1} parent=1 // pred_fallthru
      _
    // Predicated region
    $region14: #{word_step.1} parent=1 // pred_check
      _
    $region15: #{word_step.1} parent=1 // pred_check_branch
      %39 = sbr.rel (0) target = $region17
    $region16: #{word_step.1} parent=1 // pred_region
      %s41 = ssub.s32 512, 512
      %42 = vsyncadd [#allocation7], %s41
      %s43 = sshll.u32 [#allocation6], 4
      %s44 = int_to_ptr.vmem [resolvable:$true] %s43
      %49 = dma.hbm_to_vmem [thread:$0]  %s3, 512, %s44, [#allocation7], 128, 128, 8
    $region17: #{word_step.1} parent=1 // pred_fallthru
      _
    // Predicated region
    $region18: #{word_step.1} parent=1 // pred_check
      _
    $region19: #{word_step.1} parent=1 // pred_check_branch
      %51 = sbr.rel (0) target = $region21
    $region20: #{word_step.1} parent=1 // pred_region
      %s53 = ssub.s32 512, 512
      %54 = vsyncadd [#allocation7], %s53
      %s55 = sshll.u32 [#allocation8], 4
      %s56 = int_to_ptr.vmem [resolvable:$true] %s55
      %61 = dma.hbm_to_vmem [thread:$0]  %s4, 512, %s56, [#allocation7], 128, 128, 8
    $region21: #{word_step.1} parent=1 // pred_fallthru
      _
    // Predicated region
    $region22: #{word_step.1} parent=1 // pred_check
      _
    $region23: #{word_step.1} parent=1 // pred_check_branch
      %63 = sbr.rel (0) target = $region25
    $region24: #{word_step.1} parent=1 // pred_region
      _
    $region25: #{word_step.1} parent=1 // pred_fallthru
      _
    // Predicated region
    $region26: #{word_step.1} parent=1 // pred_check
      _
    $region27: #{word_step.1} parent=1 // pred_check_branch
      %65 = sbr.rel (0) target = $region29
    $region28: #{word_step.1} parent=1 // pred_region
      %s67 = ssub.s32 4096, 4096
      %68 = vsyncadd [#allocation10], %s67
      %s69 = sshll.u32 [#allocation9], 4
      %s70 = int_to_ptr.vmem [resolvable:$true] %s69
      %75 = dma.hbm_to_vmem [thread:$0]  %s6, 4096, %s70, [#allocation10], 256, 256, 16
    $region29: #{word_step.1} parent=1 // pred_fallthru
      _
    // Predicated region
    $region30: #{word_step.1} parent=1 // pred_check
      _
    $region31: #{word_step.1} parent=1 // pred_check_branch
      %77 = sbr.rel (0) target = $region33
    $region32: #{word_step.1} parent=1 // pred_region
      _
    $region33: #{word_step.1} parent=1 // pred_fallthru
      _
    // Predicated region
    $region34: #{word_step.1} parent=1 // pred_check
      _
    $region35: #{word_step.1} parent=1 // pred_check_branch
      %79 = sbr.rel (0) target = $region37
    $region36: #{word_step.1} parent=1 // pred_region
      %80 = dma.done [#allocation4], 2048
    $region37: #{word_step.1} parent=1 // pred_fallthru
      _
    // Predicated region
    $region38: #{word_step.1} parent=1 // pred_check
      _
    $region39: #{word_step.1} parent=1 // pred_check_branch
      %82 = sbr.rel (0) target = $region41
    $region40: #{word_step.1} parent=1 // pred_region
      %83 = dma.done [#allocation7], 512
    $region41: #{word_step.1} parent=1 // pred_fallthru
      _
    // Predicated region
    $region42: #{word_step.1} parent=1 // pred_check
      _
    $region43: #{word_step.1} parent=1 // pred_check_branch
      %85 = sbr.rel (0) target = $region45
    $region44: #{word_step.1} parent=1 // pred_region
      %86 = dma.done [#allocation7], 512
    $region45: #{word_step.1} parent=1 // pred_fallthru
      _
    // Predicated region
    $region46: #{word_step.1} parent=1 // pred_check
      _
    $region47: #{word_step.1} parent=1 // pred_check_branch
      %88 = sbr.rel (0) target = $region49
    $region48: #{word_step.1} parent=1 // pred_region
      %89 = dma.done [#allocation10], 4096
    $region49: #{word_step.1} parent=1 // pred_fallthru
      _
    %s90 = sld [smem:[#allocation2]]
    %v91 = vlaneseq
    %v92 = vand.u32 %v91, 127
    %v93 = vstv %s90
    %vm94 = vcmp.eq.s32.totalorder %v92, %v93
    %v95 = vsel %vm94, 1, 0
    %v96 = vcvt.s32.f32 %v95
    %v97 = vld [vmem:[#allocation3] sm:$0xff]
    %v98 = vld [vmem:[#allocation3 + $0x8] sm:$0xff]
    %v99 = vld [vmem:[#allocation3 + $0x10] sm:$0xff]
    %v100 = vld [vmem:[#allocation3 + $0x18] sm:$0xff]
    %v101 = vld [vmem:[#allocation3 + $0x20] sm:$0xff]
    %v102 = vld [vmem:[#allocation3 + $0x28] sm:$0xff]
    %v103 = vld [vmem:[#allocation3 + $0x30] sm:$0xff]
    %v104 = vld [vmem:[#allocation3 + $0x38] sm:$0xff]
    %v105 = vld [vmem:[#allocation3 + $0x40] sm:$0xff]
    %v106 = vld [vmem:[#allocation3 + $0x48] sm:$0xff]
    %v107 = vld [vmem:[#allocation3 + $0x50] sm:$0xff]
    %v108 = vld [vmem:[#allocation3 + $0x58] sm:$0xff]
    %v109 = vld [vmem:[#allocation3 + $0x60] sm:$0xff]
    %v110 = vld [vmem:[#allocation3 + $0x68] sm:$0xff]
    %v111 = vld [vmem:[#allocation3 + $0x70] sm:$0xff]
    %v112 = vld [vmem:[#allocation3 + $0x78] sm:$0xff]
    %v113 = vld [vmem:[%s1] sm:$0x1]
    %v114 = vld [vmem:[#allocation6] sm:$0xff]
    %v115 = vld [vmem:[#allocation6 + $0x8] sm:$0xff]
    %v116 = vld [vmem:[#allocation6 + $0x10] sm:$0xff]
    %v117 = vld [vmem:[#allocation6 + $0x18] sm:$0xff]
    %vm118 = vcmask 261120
    %v120 = vsel %vm118, %v113, 0
    %122 = vmatprep.subr.mxu0 0.0
    %123 = vmatpush1.msra.mxu0 0.0
    %124 = vmatprep.subr.mxu0 0.0
    %125 = vmatpush1.msra.mxu0 0.0
    %126 = vmatprep.subr.mxu0 0.0
    %127 = vmatpush1.msra.mxu0 0.0
    %128 = vmatprep.subr.mxu0 0.0
    %129 = vmatpush1.msra.mxu0 0.0
    %130 = vmatprep.subr.mxu0 0.0
    %131 = vmatpush1.msra.mxu0 0.0
    %132 = vmatprep.subr.mxu0 0.0
    %133 = vmatpush1.msra.mxu0 0.0
    %134 = vmatprep.subr.mxu0 0.0
    %135 = vmatpush1.msra.mxu0 0.0
    %136 = vmatprep.subr.mxu0 0.0
    %137 = vmatpush1.msra.mxu0 0.0
    %138 = vmatprep.subr.mxu0 0.0
    %139 = vmatpush1.msra.mxu0 0.0
    %140 = vmatprep.subr.mxu0 0.0
    %141 = vmatpush1.msra.mxu0 0.0
    %142 = vmatprep.subr.mxu0 0.0
    %143 = vmatpush1.msra.mxu0 0.0
    %144 = vmatprep.subr.mxu0 0.0
    %145 = vmatpush1.msra.mxu0 0.0
    %146 = vmatprep.subr.mxu0 0.0
    %v147 = vand.u32 %v117, 4294901760
    %148 = vmatpush1.msra.mxu0 %v147
    %149 = vmatprep.subr.mxu0 0.0
    %v150 = vand.u32 %v116, 4294901760
    %151 = vmatpush1.msra.mxu0 %v150
    %152 = vmatprep.subr.mxu0 0.0
    %v153 = vand.u32 %v115, 4294901760
    %154 = vmatpush1.msra.mxu0 %v153
    %155 = vmatprep.subr.mxu0 0.0
    %v156 = vand.u32 %v114, 4294901760
    %157 = vmatpush1.msra.mxu0 %v156
    %158 = vmatprep.subr.mxu0 0.0
    %159 = vmatpush2.msra.mxu0 0.0
    %160 = vmatprep.subr.mxu0 0.0
    %161 = vmatpush2.msra.mxu0 0.0
    %162 = vmatprep.subr.mxu0 0.0
    %163 = vmatpush2.msra.mxu0 0.0
    %164 = vmatprep.subr.mxu0 0.0
    %165 = vmatpush2.msra.mxu0 0.0
    %166 = vmatprep.subr.mxu0 0.0
    %167 = vmatpush2.msra.mxu0 0.0
    %168 = vmatprep.subr.mxu0 0.0
    %169 = vmatpush2.msra.mxu0 0.0
    %170 = vmatprep.subr.mxu0 0.0
    %171 = vmatpush2.msra.mxu0 0.0
    %172 = vmatprep.subr.mxu0 0.0
    %173 = vmatpush2.msra.mxu0 0.0
    %174 = vmatprep.subr.mxu0 0.0
    %175 = vmatpush2.msra.mxu0 0.0
    %176 = vmatprep.subr.mxu0 0.0
    %177 = vmatpush2.msra.mxu0 0.0
    %178 = vmatprep.subr.mxu0 0.0
    %179 = vmatpush2.msra.mxu0 0.0
    %180 = vmatprep.subr.mxu0 0.0
    %181 = vmatpush2.msra.mxu0 0.0
    %182 = vmatprep.subr.mxu0 0.0
    %183 = vmatpush2.msra.mxu0 0.0
    %184 = vmatprep.subr.mxu0 0.0
    %185 = vmatpush2.msra.mxu0 0.0
    %186 = vmatprep.subr.mxu0 0.0
    %187 = vmatpush2.msra.mxu0 0.0
    %188 = vmatprep.subr.mxu0 0.0
    %189 = vmatpush2.msra.mxu0 0.0
    %190 = vmatprep.mubr.f32.mxu0 0.0
    %v191 = vand.u32 %v120, 4294901760
    %v192 = vsub.f32 %v120, %v191
    %v193 = vand.u32 %v192, 4294901760
    %v194 = vsub.f32 %v192, %v193
    %v195 = vand.u32 %v194, 4294901760
    %196 = vmatmul.mubr.f32.gmra.mxu0 %v195
    %v197 = vpop.f32.mrf.mxu0
    %v198 = vadd.f32 0.0, %v197
    %v199 = vpop.f32.mrf.mxu0
    %200 = vdwg.mxu0
    %201 = vmatprep.subr.mxu0 0.0
    %202 = vmatpush1.msra.mxu0 0.0
    %203 = vmatprep.subr.mxu0 0.0
    %204 = vmatpush1.msra.mxu0 0.0
    %205 = vmatprep.subr.mxu0 0.0
    %206 = vmatpush1.msra.mxu0 0.0
    %207 = vmatprep.subr.mxu0 0.0
    %208 = vmatpush1.msra.mxu0 0.0
    %209 = vmatprep.subr.mxu0 0.0
    %210 = vmatpush1.msra.mxu0 0.0
    %211 = vmatprep.subr.mxu0 0.0
    %212 = vmatpush1.msra.mxu0 0.0
    %213 = vmatprep.subr.mxu0 0.0
    %214 = vmatpush1.msra.mxu0 0.0
    %215 = vmatprep.subr.mxu0 0.0
    %216 = vmatpush1.msra.mxu0 0.0
    %217 = vmatprep.subr.mxu0 0.0
    %218 = vmatpush1.msra.mxu0 0.0
    %219 = vmatprep.subr.mxu0 0.0
    %220 = vmatpush1.msra.mxu0 0.0
    %221 = vmatprep.subr.mxu0 0.0
    %222 = vmatpush1.msra.mxu0 0.0
    %223 = vmatprep.subr.mxu0 0.0
    %224 = vmatpush1.msra.mxu0 0.0
    %225 = vmatprep.subr.mxu0 0.0
    %v226 = vand.u32 %v117, 4294901760
    %v227 = vsub.f32 %v117, %v226
    %v228 = vand.u32 %v227, 4294901760
    %v229 = vsub.f32 %v227, %v228
    %v230 = vand.u32 %v229, 4294901760
    %231 = vmatpush1.msra.mxu0 %v230
    %232 = vmatprep.subr.mxu0 0.0
    %v233 = vand.u32 %v116, 4294901760
    %v234 = vsub.f32 %v116, %v233
    %v235 = vand.u32 %v234, 4294901760
    %v236 = vsub.f32 %v234, %v235
    %v237 = vand.u32 %v236, 4294901760
    %238 = vmatpush1.msra.mxu0 %v237
    %239 = vmatprep.subr.mxu0 0.0
    %v240 = vand.u32 %v115, 4294901760
    %v241 = vsub.f32 %v115, %v240
    %v242 = vand.u32 %v241, 4294901760
    %v243 = vsub.f32 %v241, %v242
    %v244 = vand.u32 %v243, 4294901760
    %245 = vmatpush1.msra.mxu0 %v244
    %246 = vmatprep.subr.mxu0 0.0
    %v247 = vand.u32 %v114, 4294901760
    %v248 = vsub.f32 %v114, %v247
    %v249 = vand.u32 %v248, 4294901760
    %v250 = vsub.f32 %v248, %v249
    %v251 = vand.u32 %v250, 4294901760
    %252 = vmatpush1.msra.mxu0 %v251
    %253 = vmatprep.subr.mxu0 0.0
    %254 = vmatpush2.msra.mxu0 0.0
    %255 = vmatprep.subr.mxu0 0.0
    %256 = vmatpush2.msra.mxu0 0.0
    %257 = vmatprep.subr.mxu0 0.0
    %258 = vmatpush2.msra.mxu0 0.0
    %259 = vmatprep.subr.mxu0 0.0
    %260 = vmatpush2.msra.mxu0 0.0
    %261 = vmatprep.subr.mxu0 0.0
    %262 = vmatpush2.msra.mxu0 0.0
    %263 = vmatprep.subr.mxu0 0.0
    %264 = vmatpush2.msra.mxu0 0.0
    %265 = vmatprep.subr.mxu0 0.0
    %266 = vmatpush2.msra.mxu0 0.0
    %267 = vmatprep.subr.mxu0 0.0
    %268 = vmatpush2.msra.mxu0 0.0
    %269 = vmatprep.subr.mxu0 0.0
    %270 = vmatpush2.msra.mxu0 0.0
    %271 = vmatprep.subr.mxu0 0.0
    %272 = vmatpush2.msra.mxu0 0.0
    %273 = vmatprep.subr.mxu0 0.0
    %274 = vmatpush2.msra.mxu0 0.0
    %275 = vmatprep.subr.mxu0 0.0
    %276 = vmatpush2.msra.mxu0 0.0
    %277 = vmatprep.subr.mxu0 0.0
    %278 = vmatpush2.msra.mxu0 0.0
    %279 = vmatprep.subr.mxu0 0.0
    %280 = vmatpush2.msra.mxu0 0.0
    %281 = vmatprep.subr.mxu0 0.0
    %282 = vmatpush2.msra.mxu0 0.0
    %283 = vmatprep.subr.mxu0 0.0
    %284 = vmatpush2.msra.mxu0 0.0
    %285 = vmatprep.mubr.f32.mxu0 0.0
    %v286 = vand.u32 %v120, 4294901760
    %287 = vmatmul.mubr.f32.gmra.mxu0 %v286
    %v288 = vpop.f32.mrf.mxu0
    %v289 = vadd.f32 %v198, %v288
    %v290 = vpop.f32.mrf.mxu0
    %291 = vdwg.mxu0
    %292 = vmatprep.subr.mxu0 0.0
    %293 = vmatpush1.msra.mxu0 0.0
    %294 = vmatprep.subr.mxu0 0.0
    %295 = vmatpush1.msra.mxu0 0.0
    %296 = vmatprep.subr.mxu0 0.0
    %297 = vmatpush1.msra.mxu0 0.0
    %298 = vmatprep.subr.mxu0 0.0
    %299 = vmatpush1.msra.mxu0 0.0
    %300 = vmatprep.subr.mxu0 0.0
    %301 = vmatpush1.msra.mxu0 0.0
    %302 = vmatprep.subr.mxu0 0.0
    %303 = vmatpush1.msra.mxu0 0.0
    %304 = vmatprep.subr.mxu0 0.0
    %305 = vmatpush1.msra.mxu0 0.0
    %306 = vmatprep.subr.mxu0 0.0
    %307 = vmatpush1.msra.mxu0 0.0
    %308 = vmatprep.subr.mxu0 0.0
    %309 = vmatpush1.msra.mxu0 0.0
    %310 = vmatprep.subr.mxu0 0.0
    %311 = vmatpush1.msra.mxu0 0.0
    %312 = vmatprep.subr.mxu0 0.0
    %313 = vmatpush1.msra.mxu0 0.0
    %314 = vmatprep.subr.mxu0 0.0
    %315 = vmatpush1.msra.mxu0 0.0
    %316 = vmatprep.subr.mxu0 0.0
    %v317 = vand.u32 %v117, 4294901760
    %v318 = vsub.f32 %v117, %v317
    %319 = vmatpush1.msra.mxu0 %v318
    %320 = vmatprep.subr.mxu0 0.0
    %v321 = vand.u32 %v116, 4294901760
    %v322 = vsub.f32 %v116, %v321
    %323 = vmatpush1.msra.mxu0 %v322
    %324 = vmatprep.subr.mxu0 0.0
    %v325 = vand.u32 %v115, 4294901760
    %v326 = vsub.f32 %v115, %v325
    %327 = vmatpush1.msra.mxu0 %v326
    %328 = vmatprep.subr.mxu0 0.0
    %v329 = vand.u32 %v114, 4294901760
    %v330 = vsub.f32 %v114, %v329
    %331 = vmatpush1.msra.mxu0 %v330
    %332 = vmatprep.subr.mxu0 0.0
    %333 = vmatpush2.msra.mxu0 0.0
    %334 = vmatprep.subr.mxu0 0.0
    %335 = vmatpush2.msra.mxu0 0.0
    %336 = vmatprep.subr.mxu0 0.0
    %337 = vmatpush2.msra.mxu0 0.0
    %338 = vmatprep.subr.mxu0 0.0
    %339 = vmatpush2.msra.mxu0 0.0
    %340 = vmatprep.subr.mxu0 0.0
    %341 = vmatpush2.msra.mxu0 0.0
    %342 = vmatprep.subr.mxu0 0.0
    %343 = vmatpush2.msra.mxu0 0.0
    %344 = vmatprep.subr.mxu0 0.0
    %345 = vmatpush2.msra.mxu0 0.0
    %346 = vmatprep.subr.mxu0 0.0
    %347 = vmatpush2.msra.mxu0 0.0
    %348 = vmatprep.subr.mxu0 0.0
    %349 = vmatpush2.msra.mxu0 0.0
    %350 = vmatprep.subr.mxu0 0.0
    %351 = vmatpush2.msra.mxu0 0.0
    %352 = vmatprep.subr.mxu0 0.0
    %353 = vmatpush2.msra.mxu0 0.0
    %354 = vmatprep.subr.mxu0 0.0
    %355 = vmatpush2.msra.mxu0 0.0
    %356 = vmatprep.subr.mxu0 0.0
    %357 = vmatpush2.msra.mxu0 0.0
    %358 = vmatprep.subr.mxu0 0.0
    %359 = vmatpush2.msra.mxu0 0.0
    %360 = vmatprep.subr.mxu0 0.0
    %361 = vmatpush2.msra.mxu0 0.0
    %362 = vmatprep.subr.mxu0 0.0
    %363 = vmatpush2.msra.mxu0 0.0
    %364 = vmatprep.mubr.f32.mxu0 0.0
    %v365 = vand.u32 %v120, 4294901760
    %v366 = vsub.f32 %v120, %v365
    %367 = vmatmul.mubr.f32.gmra.mxu0 %v366
    %v368 = vpop.f32.mrf.mxu0
    %v369 = vadd.f32 %v289, %v368
    %v370 = vpop.f32.mrf.mxu0
    %371 = vdwg.mxu0
    %372 = vmatprep.subr.mxu0 0.0
    %373 = vmatpush1.msra.mxu0 0.0
    %374 = vmatprep.subr.mxu0 0.0
    %375 = vmatpush1.msra.mxu0 0.0
    %376 = vmatprep.subr.mxu0 0.0
    %377 = vmatpush1.msra.mxu0 0.0
    %378 = vmatprep.subr.mxu0 0.0
    %379 = vmatpush1.msra.mxu0 0.0
    %380 = vmatprep.subr.mxu0 0.0
    %381 = vmatpush1.msra.mxu0 0.0
    %382 = vmatprep.subr.mxu0 0.0
    %383 = vmatpush1.msra.mxu0 0.0
    %384 = vmatprep.subr.mxu0 0.0
    %385 = vmatpush1.msra.mxu0 0.0
    %386 = vmatprep.subr.mxu0 0.0
    %387 = vmatpush1.msra.mxu0 0.0
    %388 = vmatprep.subr.mxu0 0.0
    %389 = vmatpush1.msra.mxu0 0.0
    %390 = vmatprep.subr.mxu0 0.0
    %391 = vmatpush1.msra.mxu0 0.0
    %392 = vmatprep.subr.mxu0 0.0
    %393 = vmatpush1.msra.mxu0 0.0
    %394 = vmatprep.subr.mxu0 0.0
    %395 = vmatpush1.msra.mxu0 0.0
    %396 = vmatprep.subr.mxu0 0.0
    %v397 = vand.u32 %v117, 4294901760
    %398 = vmatpush1.msra.mxu0 %v397
    %399 = vmatprep.subr.mxu0 0.0
    %v400 = vand.u32 %v116, 4294901760
    %401 = vmatpush1.msra.mxu0 %v400
    %402 = vmatprep.subr.mxu0 0.0
    %v403 = vand.u32 %v115, 4294901760
    %404 = vmatpush1.msra.mxu0 %v403
    %405 = vmatprep.subr.mxu0 0.0
    %v406 = vand.u32 %v114, 4294901760
    %407 = vmatpush1.msra.mxu0 %v406
    %408 = vmatprep.subr.mxu0 0.0
    %409 = vmatpush2.msra.mxu0 0.0
    %410 = vmatprep.subr.mxu0 0.0
    %411 = vmatpush2.msra.mxu0 0.0
    %412 = vmatprep.subr.mxu0 0.0
    %413 = vmatpush2.msra.mxu0 0.0
    %414 = vmatprep.subr.mxu0 0.0
    %415 = vmatpush2.msra.mxu0 0.0
    %416 = vmatprep.subr.mxu0 0.0
    %417 = vmatpush2.msra.mxu0 0.0
    %418 = vmatprep.subr.mxu0 0.0
    %419 = vmatpush2.msra.mxu0 0.0
    %420 = vmatprep.subr.mxu0 0.0
    %421 = vmatpush2.msra.mxu0 0.0
    %422 = vmatprep.subr.mxu0 0.0
    %423 = vmatpush2.msra.mxu0 0.0
    %424 = vmatprep.subr.mxu0 0.0
    %425 = vmatpush2.msra.mxu0 0.0
    %426 = vmatprep.subr.mxu0 0.0
    %427 = vmatpush2.msra.mxu0 0.0
    %428 = vmatprep.subr.mxu0 0.0
    %429 = vmatpush2.msra.mxu0 0.0
    %430 = vmatprep.subr.mxu0 0.0
    %431 = vmatpush2.msra.mxu0 0.0
    %432 = vmatprep.subr.mxu0 0.0
    %433 = vmatpush2.msra.mxu0 0.0
    %434 = vmatprep.subr.mxu0 0.0
    %435 = vmatpush2.msra.mxu0 0.0
    %436 = vmatprep.subr.mxu0 0.0
    %437 = vmatpush2.msra.mxu0 0.0
    %438 = vmatprep.subr.mxu0 0.0
    %439 = vmatpush2.msra.mxu0 0.0
    %440 = vmatprep.mubr.f32.mxu0 0.0
    %v441 = vand.u32 %v120, 4294901760
    %v442 = vsub.f32 %v120, %v441
    %v443 = vand.u32 %v442, 4294901760
    %444 = vmatmul.mubr.f32.gmra.mxu0 %v443
    %v445 = vpop.f32.mrf.mxu0
    %v446 = vadd.f32 %v369, %v445
    %v447 = vpop.f32.mrf.mxu0
    %448 = vdwg.mxu0
    %449 = vmatprep.subr.mxu0 0.0
    %450 = vmatpush1.msra.mxu0 0.0
    %451 = vmatprep.subr.mxu0 0.0
    %452 = vmatpush1.msra.mxu0 0.0
    %453 = vmatprep.subr.mxu0 0.0
    %454 = vmatpush1.msra.mxu0 0.0
    %455 = vmatprep.subr.mxu0 0.0
    %456 = vmatpush1.msra.mxu0 0.0
    %457 = vmatprep.subr.mxu0 0.0
    %458 = vmatpush1.msra.mxu0 0.0
    %459 = vmatprep.subr.mxu0 0.0
    %460 = vmatpush1.msra.mxu0 0.0
    %461 = vmatprep.subr.mxu0 0.0
    %462 = vmatpush1.msra.mxu0 0.0
    %463 = vmatprep.subr.mxu0 0.0
    %464 = vmatpush1.msra.mxu0 0.0
    %465 = vmatprep.subr.mxu0 0.0
    %466 = vmatpush1.msra.mxu0 0.0
    %467 = vmatprep.subr.mxu0 0.0
    %468 = vmatpush1.msra.mxu0 0.0
    %469 = vmatprep.subr.mxu0 0.0
    %470 = vmatpush1.msra.mxu0 0.0
    %471 = vmatprep.subr.mxu0 0.0
    %472 = vmatpush1.msra.mxu0 0.0
    %473 = vmatprep.subr.mxu0 0.0
    %v474 = vand.u32 %v117, 4294901760
    %v475 = vsub.f32 %v117, %v474
    %v476 = vand.u32 %v475, 4294901760
    %477 = vmatpush1.msra.mxu0 %v476
    %478 = vmatprep.subr.mxu0 0.0
    %v479 = vand.u32 %v116, 4294901760
    %v480 = vsub.f32 %v116, %v479
    %v481 = vand.u32 %v480, 4294901760
    %482 = vmatpush1.msra.mxu0 %v481
    %483 = vmatprep.subr.mxu0 0.0
    %v484 = vand.u32 %v115, 4294901760
    %v485 = vsub.f32 %v115, %v484
    %v486 = vand.u32 %v485, 4294901760
    %487 = vmatpush1.msra.mxu0 %v486
    %488 = vmatprep.subr.mxu0 0.0
    %v489 = vand.u32 %v114, 4294901760
    %v490 = vsub.f32 %v114, %v489
    %v491 = vand.u32 %v490, 4294901760
    %492 = vmatpush1.msra.mxu0 %v491
    %493 = vmatprep.subr.mxu0 0.0
    %494 = vmatpush2.msra.mxu0 0.0
    %495 = vmatprep.subr.mxu0 0.0
    %496 = vmatpush2.msra.mxu0 0.0
    %497 = vmatprep.subr.mxu0 0.0
    %498 = vmatpush2.msra.mxu0 0.0
    %499 = vmatprep.subr.mxu0 0.0
    %500 = vmatpush2.msra.mxu0 0.0
    %501 = vmatprep.subr.mxu0 0.0
    %502 = vmatpush2.msra.mxu0 0.0
    %503 = vmatprep.subr.mxu0 0.0
    %504 = vmatpush2.msra.mxu0 0.0
    %505 = vmatprep.subr.mxu0 0.0
    %506 = vmatpush2.msra.mxu0 0.0
    %507 = vmatprep.subr.mxu0 0.0
    %508 = vmatpush2.msra.mxu0 0.0
    %509 = vmatprep.subr.mxu0 0.0
    %510 = vmatpush2.msra.mxu0 0.0
    %511 = vmatprep.subr.mxu0 0.0
    %512 = vmatpush2.msra.mxu0 0.0
    %513 = vmatprep.subr.mxu0 0.0
    %514 = vmatpush2.msra.mxu0 0.0
    %515 = vmatprep.subr.mxu0 0.0
    %516 = vmatpush2.msra.mxu0 0.0
    %517 = vmatprep.subr.mxu0 0.0
    %518 = vmatpush2.msra.mxu0 0.0
    %519 = vmatprep.subr.mxu0 0.0
    %520 = vmatpush2.msra.mxu0 0.0
    %521 = vmatprep.subr.mxu0 0.0
    %522 = vmatpush2.msra.mxu0 0.0
    %523 = vmatprep.subr.mxu0 0.0
    %524 = vmatpush2.msra.mxu0 0.0
    %525 = vmatprep.mubr.f32.mxu0 0.0
    %v526 = vand.u32 %v120, 4294901760
    %527 = vmatmul.mubr.f32.gmra.mxu0 %v526
    %v528 = vpop.f32.mrf.mxu0
    %v529 = vadd.f32 %v446, %v528
    %v530 = vpop.f32.mrf.mxu0
    %531 = vdwg.mxu0
    %532 = vmatprep.subr.mxu0 0.0
    %533 = vmatpush1.msra.mxu0 0.0
    %534 = vmatprep.subr.mxu0 0.0
    %535 = vmatpush1.msra.mxu0 0.0
    %536 = vmatprep.subr.mxu0 0.0
    %537 = vmatpush1.msra.mxu0 0.0
    %538 = vmatprep.subr.mxu0 0.0
    %539 = vmatpush1.msra.mxu0 0.0
    %540 = vmatprep.subr.mxu0 0.0
    %541 = vmatpush1.msra.mxu0 0.0
    %542 = vmatprep.subr.mxu0 0.0
    %543 = vmatpush1.msra.mxu0 0.0
    %544 = vmatprep.subr.mxu0 0.0
    %545 = vmatpush1.msra.mxu0 0.0
    %546 = vmatprep.subr.mxu0 0.0
    %547 = vmatpush1.msra.mxu0 0.0
    %548 = vmatprep.subr.mxu0 0.0
    %549 = vmatpush1.msra.mxu0 0.0
    %550 = vmatprep.subr.mxu0 0.0
    %551 = vmatpush1.msra.mxu0 0.0
    %552 = vmatprep.subr.mxu0 0.0
    %553 = vmatpush1.msra.mxu0 0.0
    %554 = vmatprep.subr.mxu0 0.0
    %555 = vmatpush1.msra.mxu0 0.0
    %556 = vmatprep.subr.mxu0 0.0
    %v557 = vand.u32 %v117, 4294901760
    %558 = vmatpush1.msra.mxu0 %v557
    %559 = vmatprep.subr.mxu0 0.0
    %v560 = vand.u32 %v116, 4294901760
    %561 = vmatpush1.msra.mxu0 %v560
    %562 = vmatprep.subr.mxu0 0.0
    %v563 = vand.u32 %v115, 4294901760
    %564 = vmatpush1.msra.mxu0 %v563
    %565 = vmatprep.subr.mxu0 0.0
    %v566 = vand.u32 %v114, 4294901760
    %567 = vmatpush1.msra.mxu0 %v566
    %568 = vmatprep.subr.mxu0 0.0
    %569 = vmatpush2.msra.mxu0 0.0
    %570 = vmatprep.subr.mxu0 0.0
    %571 = vmatpush2.msra.mxu0 0.0
    %572 = vmatprep.subr.mxu0 0.0
    %573 = vmatpush2.msra.mxu0 0.0
    %574 = vmatprep.subr.mxu0 0.0
    %575 = vmatpush2.msra.mxu0 0.0
    %576 = vmatprep.subr.mxu0 0.0
    %577 = vmatpush2.msra.mxu0 0.0
    %578 = vmatprep.subr.mxu0 0.0
    %579 = vmatpush2.msra.mxu0 0.0
    %580 = vmatprep.subr.mxu0 0.0
    %581 = vmatpush2.msra.mxu0 0.0
    %582 = vmatprep.subr.mxu0 0.0
    %583 = vmatpush2.msra.mxu0 0.0
    %584 = vmatprep.subr.mxu0 0.0
    %585 = vmatpush2.msra.mxu0 0.0
    %586 = vmatprep.subr.mxu0 0.0
    %587 = vmatpush2.msra.mxu0 0.0
    %588 = vmatprep.subr.mxu0 0.0
    %589 = vmatpush2.msra.mxu0 0.0
    %590 = vmatprep.subr.mxu0 0.0
    %591 = vmatpush2.msra.mxu0 0.0
    %592 = vmatprep.subr.mxu0 0.0
    %593 = vmatpush2.msra.mxu0 0.0
    %594 = vmatprep.subr.mxu0 0.0
    %595 = vmatpush2.msra.mxu0 0.0
    %596 = vmatprep.subr.mxu0 0.0
    %597 = vmatpush2.msra.mxu0 0.0
    %598 = vmatprep.subr.mxu0 0.0
    %599 = vmatpush2.msra.mxu0 0.0
    %600 = vmatprep.mubr.f32.mxu0 0.0
    %v601 = vand.u32 %v120, 4294901760
    %602 = vmatmul.mubr.f32.gmra.mxu0 %v601
    %v603 = vpop.f32.mrf.mxu0
    %v604 = vadd.f32 %v529, %v603
    %v605 = vpop.f32.mrf.mxu0
    %606 = vdwg.mxu0
    %607 = vmatprep.subr.mxu0 0.0
    %v608 = vand.u32 %v112, 4294901760
    %609 = vmatpush1.msra.mxu0 %v608
    %610 = vmatprep.subr.mxu0 0.0
    %v611 = vand.u32 %v111, 4294901760
    %612 = vmatpush1.msra.mxu0 %v611
    %613 = vmatprep.subr.mxu0 0.0
    %v614 = vand.u32 %v110, 4294901760
    %615 = vmatpush1.msra.mxu0 %v614
    %616 = vmatprep.subr.mxu0 0.0
    %v617 = vand.u32 %v109, 4294901760
    %618 = vmatpush1.msra.mxu0 %v617
    %619 = vmatprep.subr.mxu0 0.0
    %v620 = vand.u32 %v108, 4294901760
    %621 = vmatpush1.msra.mxu0 %v620
    %622 = vmatprep.subr.mxu0 0.0
    %v623 = vand.u32 %v107, 4294901760
    %624 = vmatpush1.msra.mxu0 %v623
    %625 = vmatprep.subr.mxu0 0.0
    %v626 = vand.u32 %v106, 4294901760
    %627 = vmatpush1.msra.mxu0 %v626
    %628 = vmatprep.subr.mxu0 0.0
    %v629 = vand.u32 %v105, 4294901760
    %630 = vmatpush1.msra.mxu0 %v629
    %631 = vmatprep.subr.mxu0 0.0
    %v632 = vand.u32 %v104, 4294901760
    %633 = vmatpush1.msra.mxu0 %v632
    %634 = vmatprep.subr.mxu0 0.0
    %v635 = vand.u32 %v103, 4294901760
    %636 = vmatpush1.msra.mxu0 %v635
    %637 = vmatprep.subr.mxu0 0.0
    %v638 = vand.u32 %v102, 4294901760
    %639 = vmatpush1.msra.mxu0 %v638
    %640 = vmatprep.subr.mxu0 0.0
    %v641 = vand.u32 %v101, 4294901760
    %642 = vmatpush1.msra.mxu0 %v641
    %643 = vmatprep.subr.mxu0 0.0
    %v644 = vand.u32 %v100, 4294901760
    %645 = vmatpush1.msra.mxu0 %v644
    %646 = vmatprep.subr.mxu0 0.0
    %v647 = vand.u32 %v99, 4294901760
    %648 = vmatpush1.msra.mxu0 %v647
    %649 = vmatprep.subr.mxu0 0.0
    %v650 = vand.u32 %v98, 4294901760
    %651 = vmatpush1.msra.mxu0 %v650
    %652 = vmatprep.subr.mxu0 0.0
    %v653 = vand.u32 %v97, 4294901760
    %654 = vmatpush1.msra.mxu0 %v653
    %655 = vmatprep.subr.mxu0 0.0
    %656 = vmatpush2.msra.mxu0 0.0
    %657 = vmatprep.subr.mxu0 0.0
    %658 = vmatpush2.msra.mxu0 0.0
    %659 = vmatprep.subr.mxu0 0.0
    %660 = vmatpush2.msra.mxu0 0.0
    %661 = vmatprep.subr.mxu0 0.0
    %662 = vmatpush2.msra.mxu0 0.0
    %663 = vmatprep.subr.mxu0 0.0
    %664 = vmatpush2.msra.mxu0 0.0
    %665 = vmatprep.subr.mxu0 0.0
    %666 = vmatpush2.msra.mxu0 0.0
    %667 = vmatprep.subr.mxu0 0.0
    %668 = vmatpush2.msra.mxu0 0.0
    %669 = vmatprep.subr.mxu0 0.0
    %670 = vmatpush2.msra.mxu0 0.0
    %671 = vmatprep.subr.mxu0 0.0
    %672 = vmatpush2.msra.mxu0 0.0
    %673 = vmatprep.subr.mxu0 0.0
    %674 = vmatpush2.msra.mxu0 0.0
    %675 = vmatprep.subr.mxu0 0.0
    %676 = vmatpush2.msra.mxu0 0.0
    %677 = vmatprep.subr.mxu0 0.0
    %678 = vmatpush2.msra.mxu0 0.0
    %679 = vmatprep.subr.mxu0 0.0
    %680 = vmatpush2.msra.mxu0 0.0
    %681 = vmatprep.subr.mxu0 0.0
    %682 = vmatpush2.msra.mxu0 0.0
    %683 = vmatprep.subr.mxu0 0.0
    %684 = vmatpush2.msra.mxu0 0.0
    %685 = vmatprep.subr.mxu0 0.0
    %686 = vmatpush2.msra.mxu0 0.0
    %687 = vmatprep.mubr.f32.mxu0 0.0
    %v688 = vand.u32 %v96, 4294901760
    %v689 = vsub.f32 %v96, %v688
    %v690 = vand.u32 %v689, 4294901760
    %v691 = vsub.f32 %v689, %v690
    %v692 = vand.u32 %v691, 4294901760
    %693 = vmatmul.mubr.f32.gmra.mxu0 %v692
    %v694 = vpop.f32.mrf.mxu0
    %v695 = vadd.f32 %v604, %v694
    %v696 = vpop.f32.mrf.mxu0
    %697 = vdwg.mxu0
    %698 = vmatprep.subr.mxu0 0.0
    %v699 = vand.u32 %v112, 4294901760
    %v700 = vsub.f32 %v112, %v699
    %v701 = vand.u32 %v700, 4294901760
    %v702 = vsub.f32 %v700, %v701
    %v703 = vand.u32 %v702, 4294901760
    %704 = vmatpush1.msra.mxu0 %v703
    %705 = vmatprep.subr.mxu0 0.0
    %v706 = vand.u32 %v111, 4294901760
    %v707 = vsub.f32 %v111, %v706
    %v708 = vand.u32 %v707, 4294901760
    %v709 = vsub.f32 %v707, %v708
    %v710 = vand.u32 %v709, 4294901760
    %711 = vmatpush1.msra.mxu0 %v710
    %712 = vmatprep.subr.mxu0 0.0
    %v713 = vand.u32 %v110, 4294901760
    %v714 = vsub.f32 %v110, %v713
    %v715 = vand.u32 %v714, 4294901760
    %v716 = vsub.f32 %v714, %v715
    %v717 = vand.u32 %v716, 4294901760
    %718 = vmatpush1.msra.mxu0 %v717
    %719 = vmatprep.subr.mxu0 0.0
    %v720 = vand.u32 %v109, 4294901760
    %v721 = vsub.f32 %v109, %v720
    %v722 = vand.u32 %v721, 4294901760
    %v723 = vsub.f32 %v721, %v722
    %v724 = vand.u32 %v723, 4294901760
    %725 = vmatpush1.msra.mxu0 %v724
    %726 = vmatprep.subr.mxu0 0.0
    %v727 = vand.u32 %v108, 4294901760
    %v728 = vsub.f32 %v108, %v727
    %v729 = vand.u32 %v728, 4294901760
    %v730 = vsub.f32 %v728, %v729
    %v731 = vand.u32 %v730, 4294901760
    %732 = vmatpush1.msra.mxu0 %v731
    %733 = vmatprep.subr.mxu0 0.0
    %v734 = vand.u32 %v107, 4294901760
    %v735 = vsub.f32 %v107, %v734
    %v736 = vand.u32 %v735, 4294901760
    %v737 = vsub.f32 %v735, %v736
    %v738 = vand.u32 %v737, 4294901760
    %739 = vmatpush1.msra.mxu0 %v738
    %740 = vmatprep.subr.mxu0 0.0
    %v741 = vand.u32 %v106, 4294901760
    %v742 = vsub.f32 %v106, %v741
    %v743 = vand.u32 %v742, 4294901760
    %v744 = vsub.f32 %v742, %v743
    %v745 = vand.u32 %v744, 4294901760
    %746 = vmatpush1.msra.mxu0 %v745
    %747 = vmatprep.subr.mxu0 0.0
    %v748 = vand.u32 %v105, 4294901760
    %v749 = vsub.f32 %v105, %v748
    %v750 = vand.u32 %v749, 4294901760
    %v751 = vsub.f32 %v749, %v750
    %v752 = vand.u32 %v751, 4294901760
    %753 = vmatpush1.msra.mxu0 %v752
    %754 = vmatprep.subr.mxu0 0.0
    %v755 = vand.u32 %v104, 4294901760
    %v756 = vsub.f32 %v104, %v755
    %v757 = vand.u32 %v756, 4294901760
    %v758 = vsub.f32 %v756, %v757
    %v759 = vand.u32 %v758, 4294901760
    %760 = vmatpush1.msra.mxu0 %v759
    %761 = vmatprep.subr.mxu0 0.0
    %v762 = vand.u32 %v103, 4294901760
    %v763 = vsub.f32 %v103, %v762
    %v764 = vand.u32 %v763, 4294901760
    %v765 = vsub.f32 %v763, %v764
    %v766 = vand.u32 %v765, 4294901760
    %767 = vmatpush1.msra.mxu0 %v766
    %768 = vmatprep.subr.mxu0 0.0
    %v769 = vand.u32 %v102, 4294901760
    %v770 = vsub.f32 %v102, %v769
    %v771 = vand.u32 %v770, 4294901760
    %v772 = vsub.f32 %v770, %v771
    %v773 = vand.u32 %v772, 4294901760
    %774 = vmatpush1.msra.mxu0 %v773
    %775 = vmatprep.subr.mxu0 0.0
    %v776 = vand.u32 %v101, 4294901760
    %v777 = vsub.f32 %v101, %v776
    %v778 = vand.u32 %v777, 4294901760
    %v779 = vsub.f32 %v777, %v778
    %v780 = vand.u32 %v779, 4294901760
    %781 = vmatpush1.msra.mxu0 %v780
    %782 = vmatprep.subr.mxu0 0.0
    %v783 = vand.u32 %v100, 4294901760
    %v784 = vsub.f32 %v100, %v783
    %v785 = vand.u32 %v784, 4294901760
    %v786 = vsub.f32 %v784, %v785
    %v787 = vand.u32 %v786, 4294901760
    %788 = vmatpush1.msra.mxu0 %v787
    %789 = vmatprep.subr.mxu0 0.0
    %v790 = vand.u32 %v99, 4294901760
    %v791 = vsub.f32 %v99, %v790
    %v792 = vand.u32 %v791, 4294901760
    %v793 = vsub.f32 %v791, %v792
    %v794 = vand.u32 %v793, 4294901760
    %795 = vmatpush1.msra.mxu0 %v794
    %796 = vmatprep.subr.mxu0 0.0
    %v797 = vand.u32 %v98, 4294901760
    %v798 = vsub.f32 %v98, %v797
    %v799 = vand.u32 %v798, 4294901760
    %v800 = vsub.f32 %v798, %v799
    %v801 = vand.u32 %v800, 4294901760
    %802 = vmatpush1.msra.mxu0 %v801
    %803 = vmatprep.subr.mxu0 0.0
    %v804 = vand.u32 %v97, 4294901760
    %v805 = vsub.f32 %v97, %v804
    %v806 = vand.u32 %v805, 4294901760
    %v807 = vsub.f32 %v805, %v806
    %v808 = vand.u32 %v807, 4294901760
    %809 = vmatpush1.msra.mxu0 %v808
    %810 = vmatprep.subr.mxu0 0.0
    %811 = vmatpush2.msra.mxu0 0.0
    %812 = vmatprep.subr.mxu0 0.0
    %813 = vmatpush2.msra.mxu0 0.0
    %814 = vmatprep.subr.mxu0 0.0
    %815 = vmatpush2.msra.mxu0 0.0
    %816 = vmatprep.subr.mxu0 0.0
    %817 = vmatpush2.msra.mxu0 0.0
    %818 = vmatprep.subr.mxu0 0.0
    %819 = vmatpush2.msra.mxu0 0.0
    %820 = vmatprep.subr.mxu0 0.0
    %821 = vmatpush2.msra.mxu0 0.0
    %822 = vmatprep.subr.mxu0 0.0
    %823 = vmatpush2.msra.mxu0 0.0
    %824 = vmatprep.subr.mxu0 0.0
    %825 = vmatpush2.msra.mxu0 0.0
    %826 = vmatprep.subr.mxu0 0.0
    %827 = vmatpush2.msra.mxu0 0.0
    %828 = vmatprep.subr.mxu0 0.0
    %829 = vmatpush2.msra.mxu0 0.0
    %830 = vmatprep.subr.mxu0 0.0
    %831 = vmatpush2.msra.mxu0 0.0
    %832 = vmatprep.subr.mxu0 0.0
    %833 = vmatpush2.msra.mxu0 0.0
    %834 = vmatprep.subr.mxu0 0.0
    %835 = vmatpush2.msra.mxu0 0.0
    %836 = vmatprep.subr.mxu0 0.0
    %837 = vmatpush2.msra.mxu0 0.0
    %838 = vmatprep.subr.mxu0 0.0
    %839 = vmatpush2.msra.mxu0 0.0
    %840 = vmatprep.subr.mxu0 0.0
    %841 = vmatpush2.msra.mxu0 0.0
    %842 = vmatprep.mubr.f32.mxu0 0.0
    %v843 = vand.u32 %v96, 4294901760
    %844 = vmatmul.mubr.f32.gmra.mxu0 %v843
    %v845 = vpop.f32.mrf.mxu0
    %v846 = vadd.f32 %v695, %v845
    %v847 = vpop.f32.mrf.mxu0
    %848 = vdwg.mxu0
    %849 = vmatprep.subr.mxu0 0.0
    %v850 = vand.u32 %v112, 4294901760
    %v851 = vsub.f32 %v112, %v850
    %852 = vmatpush1.msra.mxu0 %v851
    %853 = vmatprep.subr.mxu0 0.0
    %v854 = vand.u32 %v111, 4294901760
    %v855 = vsub.f32 %v111, %v854
    %856 = vmatpush1.msra.mxu0 %v855
    %857 = vmatprep.subr.mxu0 0.0
    %v858 = vand.u32 %v110, 4294901760
    %v859 = vsub.f32 %v110, %v858
    %860 = vmatpush1.msra.mxu0 %v859
    %861 = vmatprep.subr.mxu0 0.0
    %v862 = vand.u32 %v109, 4294901760
    %v863 = vsub.f32 %v109, %v862
    %864 = vmatpush1.msra.mxu0 %v863
    %865 = vmatprep.subr.mxu0 0.0
    %v866 = vand.u32 %v108, 4294901760
    %v867 = vsub.f32 %v108, %v866
    %868 = vmatpush1.msra.mxu0 %v867
    %869 = vmatprep.subr.mxu0 0.0
    %v870 = vand.u32 %v107, 4294901760
    %v871 = vsub.f32 %v107, %v870
    %872 = vmatpush1.msra.mxu0 %v871
    %873 = vmatprep.subr.mxu0 0.0
    %v874 = vand.u32 %v106, 4294901760
    %v875 = vsub.f32 %v106, %v874
    %876 = vmatpush1.msra.mxu0 %v875
    %877 = vmatprep.subr.mxu0 0.0
    %v878 = vand.u32 %v105, 4294901760
    %v879 = vsub.f32 %v105, %v878
    %880 = vmatpush1.msra.mxu0 %v879
    %881 = vmatprep.subr.mxu0 0.0
    %v882 = vand.u32 %v104, 4294901760
    %v883 = vsub.f32 %v104, %v882
    %884 = vmatpush1.msra.mxu0 %v883
    %885 = vmatprep.subr.mxu0 0.0
    %v886 = vand.u32 %v103, 4294901760
    %v887 = vsub.f32 %v103, %v886
    %888 = vmatpush1.msra.mxu0 %v887
    %889 = vmatprep.subr.mxu0 0.0
    %v890 = vand.u32 %v102, 4294901760
    %v891 = vsub.f32 %v102, %v890
    %892 = vmatpush1.msra.mxu0 %v891
    %893 = vmatprep.subr.mxu0 0.0
    %v894 = vand.u32 %v101, 4294901760
    %v895 = vsub.f32 %v101, %v894
    %896 = vmatpush1.msra.mxu0 %v895
    %897 = vmatprep.subr.mxu0 0.0
    %v898 = vand.u32 %v100, 4294901760
    %v899 = vsub.f32 %v100, %v898
    %900 = vmatpush1.msra.mxu0 %v899
    %901 = vmatprep.subr.mxu0 0.0
    %v902 = vand.u32 %v99, 4294901760
    %v903 = vsub.f32 %v99, %v902
    %904 = vmatpush1.msra.mxu0 %v903
    %905 = vmatprep.subr.mxu0 0.0
    %v906 = vand.u32 %v98, 4294901760
    %v907 = vsub.f32 %v98, %v906
    %908 = vmatpush1.msra.mxu0 %v907
    %909 = vmatprep.subr.mxu0 0.0
    %v910 = vand.u32 %v97, 4294901760
    %v911 = vsub.f32 %v97, %v910
    %912 = vmatpush1.msra.mxu0 %v911
    %913 = vmatprep.subr.mxu0 0.0
    %914 = vmatpush2.msra.mxu0 0.0
    %915 = vmatprep.subr.mxu0 0.0
    %916 = vmatpush2.msra.mxu0 0.0
    %917 = vmatprep.subr.mxu0 0.0
    %918 = vmatpush2.msra.mxu0 0.0
    %919 = vmatprep.subr.mxu0 0.0
    %920 = vmatpush2.msra.mxu0 0.0
    %921 = vmatprep.subr.mxu0 0.0
    %922 = vmatpush2.msra.mxu0 0.0
    %923 = vmatprep.subr.mxu0 0.0
    %924 = vmatpush2.msra.mxu0 0.0
    %925 = vmatprep.subr.mxu0 0.0
    %926 = vmatpush2.msra.mxu0 0.0
    %927 = vmatprep.subr.mxu0 0.0
    %928 = vmatpush2.msra.mxu0 0.0
    %929 = vmatprep.subr.mxu0 0.0
    %930 = vmatpush2.msra.mxu0 0.0
    %931 = vmatprep.subr.mxu0 0.0
    %932 = vmatpush2.msra.mxu0 0.0
    %933 = vmatprep.subr.mxu0 0.0
    %934 = vmatpush2.msra.mxu0 0.0
    %935 = vmatprep.subr.mxu0 0.0
    %936 = vmatpush2.msra.mxu0 0.0
    %937 = vmatprep.subr.mxu0 0.0
    %938 = vmatpush2.msra.mxu0 0.0
    %939 = vmatprep.subr.mxu0 0.0
    %940 = vmatpush2.msra.mxu0 0.0
    %941 = vmatprep.subr.mxu0 0.0
    %942 = vmatpush2.msra.mxu0 0.0
    %943 = vmatprep.subr.mxu0 0.0
    %944 = vmatpush2.msra.mxu0 0.0
    %945 = vmatprep.mubr.f32.mxu0 0.0
    %v946 = vand.u32 %v96, 4294901760
    %v947 = vsub.f32 %v96, %v946
    %948 = vmatmul.mubr.f32.gmra.mxu0 %v947
    %v949 = vpop.f32.mrf.mxu0
    %v950 = vadd.f32 %v846, %v949
    %v951 = vpop.f32.mrf.mxu0
    %952 = vdwg.mxu0
    %953 = vmatprep.subr.mxu0 0.0
    %v954 = vand.u32 %v112, 4294901760
    %955 = vmatpush1.msra.mxu0 %v954
    %956 = vmatprep.subr.mxu0 0.0
    %v957 = vand.u32 %v111, 4294901760
    %958 = vmatpush1.msra.mxu0 %v957
    %959 = vmatprep.subr.mxu0 0.0
    %v960 = vand.u32 %v110, 4294901760
    %961 = vmatpush1.msra.mxu0 %v960
    %962 = vmatprep.subr.mxu0 0.0
    %v963 = vand.u32 %v109, 4294901760
    %964 = vmatpush1.msra.mxu0 %v963
    %965 = vmatprep.subr.mxu0 0.0
    %v966 = vand.u32 %v108, 4294901760
    %967 = vmatpush1.msra.mxu0 %v966
    %968 = vmatprep.subr.mxu0 0.0
    %v969 = vand.u32 %v107, 4294901760
    %970 = vmatpush1.msra.mxu0 %v969
    %971 = vmatprep.subr.mxu0 0.0
    %v972 = vand.u32 %v106, 4294901760
    %973 = vmatpush1.msra.mxu0 %v972
    %974 = vmatprep.subr.mxu0 0.0
    %v975 = vand.u32 %v105, 4294901760
    %976 = vmatpush1.msra.mxu0 %v975
    %977 = vmatprep.subr.mxu0 0.0
    %v978 = vand.u32 %v104, 4294901760
    %979 = vmatpush1.msra.mxu0 %v978
    %980 = vmatprep.subr.mxu0 0.0
    %v981 = vand.u32 %v103, 4294901760
    %982 = vmatpush1.msra.mxu0 %v981
    %983 = vmatprep.subr.mxu0 0.0
    %v984 = vand.u32 %v102, 4294901760
    %985 = vmatpush1.msra.mxu0 %v984
    %986 = vmatprep.subr.mxu0 0.0
    %v987 = vand.u32 %v101, 4294901760
    %988 = vmatpush1.msra.mxu0 %v987
    %989 = vmatprep.subr.mxu0 0.0
    %v990 = vand.u32 %v100, 4294901760
    %991 = vmatpush1.msra.mxu0 %v990
    %992 = vmatprep.subr.mxu0 0.0
    %v993 = vand.u32 %v99, 4294901760
    %994 = vmatpush1.msra.mxu0 %v993
    %995 = vmatprep.subr.mxu0 0.0
    %v996 = vand.u32 %v98, 4294901760
    %997 = vmatpush1.msra.mxu0 %v996
    %998 = vmatprep.subr.mxu0 0.0
    %v999 = vand.u32 %v97, 4294901760
    %1000 = vmatpush1.msra.mxu0 %v999
    %1001 = vmatprep.subr.mxu0 0.0
    %1002 = vmatpush2.msra.mxu0 0.0
    %1003 = vmatprep.subr.mxu0 0.0
    %1004 = vmatpush2.msra.mxu0 0.0
    %1005 = vmatprep.subr.mxu0 0.0
    %1006 = vmatpush2.msra.mxu0 0.0
    %1007 = vmatprep.subr.mxu0 0.0
    %1008 = vmatpush2.msra.mxu0 0.0
    %1009 = vmatprep.subr.mxu0 0.0
    %1010 = vmatpush2.msra.mxu0 0.0
    %1011 = vmatprep.subr.mxu0 0.0
    %1012 = vmatpush2.msra.mxu0 0.0
    %1013 = vmatprep.subr.mxu0 0.0
    %1014 = vmatpush2.msra.mxu0 0.0
    %1015 = vmatprep.subr.mxu0 0.0
    %1016 = vmatpush2.msra.mxu0 0.0
    %1017 = vmatprep.subr.mxu0 0.0
    %1018 = vmatpush2.msra.mxu0 0.0
    %1019 = vmatprep.subr.mxu0 0.0
    %1020 = vmatpush2.msra.mxu0 0.0
    %1021 = vmatprep.subr.mxu0 0.0
    %1022 = vmatpush2.msra.mxu0 0.0
    %1023 = vmatprep.subr.mxu0 0.0
    %1024 = vmatpush2.msra.mxu0 0.0
    %1025 = vmatprep.subr.mxu0 0.0
    %1026 = vmatpush2.msra.mxu0 0.0
    %1027 = vmatprep.subr.mxu0 0.0
    %1028 = vmatpush2.msra.mxu0 0.0
    %1029 = vmatprep.subr.mxu0 0.0
    %1030 = vmatpush2.msra.mxu0 0.0
    %1031 = vmatprep.subr.mxu0 0.0
    %1032 = vmatpush2.msra.mxu0 0.0
    %1033 = vmatprep.mubr.f32.mxu0 0.0
    %v1034 = vand.u32 %v96, 4294901760
    %v1035 = vsub.f32 %v96, %v1034
    %v1036 = vand.u32 %v1035, 4294901760
    %1037 = vmatmul.mubr.f32.gmra.mxu0 %v1036
    %v1038 = vpop.f32.mrf.mxu0
    %v1039 = vadd.f32 %v950, %v1038
    %v1040 = vpop.f32.mrf.mxu0
    %1041 = vdwg.mxu0
    %1042 = vmatprep.subr.mxu0 0.0
    %v1043 = vand.u32 %v112, 4294901760
    %v1044 = vsub.f32 %v112, %v1043
    %v1045 = vand.u32 %v1044, 4294901760
    %1046 = vmatpush1.msra.mxu0 %v1045
    %1047 = vmatprep.subr.mxu0 0.0
    %v1048 = vand.u32 %v111, 4294901760
    %v1049 = vsub.f32 %v111, %v1048
    %v1050 = vand.u32 %v1049, 4294901760
    %1051 = vmatpush1.msra.mxu0 %v1050
    %1052 = vmatprep.subr.mxu0 0.0
    %v1053 = vand.u32 %v110, 4294901760
    %v1054 = vsub.f32 %v110, %v1053
    %v1055 = vand.u32 %v1054, 4294901760
    %1056 = vmatpush1.msra.mxu0 %v1055
    %1057 = vmatprep.subr.mxu0 0.0
    %v1058 = vand.u32 %v109, 4294901760
    %v1059 = vsub.f32 %v109, %v1058
    %v1060 = vand.u32 %v1059, 4294901760
    %1061 = vmatpush1.msra.mxu0 %v1060
    %1062 = vmatprep.subr.mxu0 0.0
    %v1063 = vand.u32 %v108, 4294901760
    %v1064 = vsub.f32 %v108, %v1063
    %v1065 = vand.u32 %v1064, 4294901760
    %1066 = vmatpush1.msra.mxu0 %v1065
    %1067 = vmatprep.subr.mxu0 0.0
    %v1068 = vand.u32 %v107, 4294901760
    %v1069 = vsub.f32 %v107, %v1068
    %v1070 = vand.u32 %v1069, 4294901760
    %1071 = vmatpush1.msra.mxu0 %v1070
    %1072 = vmatprep.subr.mxu0 0.0
    %v1073 = vand.u32 %v106, 4294901760
    %v1074 = vsub.f32 %v106, %v1073
    %v1075 = vand.u32 %v1074, 4294901760
    %1076 = vmatpush1.msra.mxu0 %v1075
    %1077 = vmatprep.subr.mxu0 0.0
    %v1078 = vand.u32 %v105, 4294901760
    %v1079 = vsub.f32 %v105, %v1078
    %v1080 = vand.u32 %v1079, 4294901760
    %1081 = vmatpush1.msra.mxu0 %v1080
    %1082 = vmatprep.subr.mxu0 0.0
    %v1083 = vand.u32 %v104, 4294901760
    %v1084 = vsub.f32 %v104, %v1083
    %v1085 = vand.u32 %v1084, 4294901760
    %1086 = vmatpush1.msra.mxu0 %v1085
    %1087 = vmatprep.subr.mxu0 0.0
    %v1088 = vand.u32 %v103, 4294901760
    %v1089 = vsub.f32 %v103, %v1088
    %v1090 = vand.u32 %v1089, 4294901760
    %1091 = vmatpush1.msra.mxu0 %v1090
    %1092 = vmatprep.subr.mxu0 0.0
    %v1093 = vand.u32 %v102, 4294901760
    %v1094 = vsub.f32 %v102, %v1093
    %v1095 = vand.u32 %v1094, 4294901760
    %1096 = vmatpush1.msra.mxu0 %v1095
    %1097 = vmatprep.subr.mxu0 0.0
    %v1098 = vand.u32 %v101, 4294901760
    %v1099 = vsub.f32 %v101, %v1098
    %v1100 = vand.u32 %v1099, 4294901760
    %1101 = vmatpush1.msra.mxu0 %v1100
    %1102 = vmatprep.subr.mxu0 0.0
    %v1103 = vand.u32 %v100, 4294901760
    %v1104 = vsub.f32 %v100, %v1103
    %v1105 = vand.u32 %v1104, 4294901760
    %1106 = vmatpush1.msra.mxu0 %v1105
    %1107 = vmatprep.subr.mxu0 0.0
    %v1108 = vand.u32 %v99, 4294901760
    %v1109 = vsub.f32 %v99, %v1108
    %v1110 = vand.u32 %v1109, 4294901760
    %1111 = vmatpush1.msra.mxu0 %v1110
    %1112 = vmatprep.subr.mxu0 0.0
    %v1113 = vand.u32 %v98, 4294901760
    %v1114 = vsub.f32 %v98, %v1113
    %v1115 = vand.u32 %v1114, 4294901760
    %1116 = vmatpush1.msra.mxu0 %v1115
    %1117 = vmatprep.subr.mxu0 0.0
    %v1118 = vand.u32 %v97, 4294901760
    %v1119 = vsub.f32 %v97, %v1118
    %v1120 = vand.u32 %v1119, 4294901760
    %1121 = vmatpush1.msra.mxu0 %v1120
    %1122 = vmatprep.subr.mxu0 0.0
    %1123 = vmatpush2.msra.mxu0 0.0
    %1124 = vmatprep.subr.mxu0 0.0
    %1125 = vmatpush2.msra.mxu0 0.0
    %1126 = vmatprep.subr.mxu0 0.0
    %1127 = vmatpush2.msra.mxu0 0.0
    %1128 = vmatprep.subr.mxu0 0.0
    %1129 = vmatpush2.msra.mxu0 0.0
    %1130 = vmatprep.subr.mxu0 0.0
    %1131 = vmatpush2.msra.mxu0 0.0
    %1132 = vmatprep.subr.mxu0 0.0
    %1133 = vmatpush2.msra.mxu0 0.0
    %1134 = vmatprep.subr.mxu0 0.0
    %1135 = vmatpush2.msra.mxu0 0.0
    %1136 = vmatprep.subr.mxu0 0.0
    %1137 = vmatpush2.msra.mxu0 0.0
    %1138 = vmatprep.subr.mxu0 0.0
    %1139 = vmatpush2.msra.mxu0 0.0
    %1140 = vmatprep.subr.mxu0 0.0
    %1141 = vmatpush2.msra.mxu0 0.0
    %1142 = vmatprep.subr.mxu0 0.0
    %1143 = vmatpush2.msra.mxu0 0.0
    %1144 = vmatprep.subr.mxu0 0.0
    %1145 = vmatpush2.msra.mxu0 0.0
    %1146 = vmatprep.subr.mxu0 0.0
    %1147 = vmatpush2.msra.mxu0 0.0
    %1148 = vmatprep.subr.mxu0 0.0
    %1149 = vmatpush2.msra.mxu0 0.0
    %1150 = vmatprep.subr.mxu0 0.0
    %1151 = vmatpush2.msra.mxu0 0.0
    %1152 = vmatprep.subr.mxu0 0.0
    %1153 = vmatpush2.msra.mxu0 0.0
    %1154 = vmatprep.mubr.f32.mxu0 0.0
    %v1155 = vand.u32 %v96, 4294901760
    %1156 = vmatmul.mubr.f32.gmra.mxu0 %v1155
    %v1157 = vpop.f32.mrf.mxu0
    %v1158 = vadd.f32 %v1039, %v1157
    %v1159 = vpop.f32.mrf.mxu0
    %1160 = vdwg.mxu0
    %1161 = vmatprep.subr.mxu0 0.0
    %v1162 = vand.u32 %v112, 4294901760
    %1163 = vmatpush1.msra.mxu0 %v1162
    %1164 = vmatprep.subr.mxu0 0.0
    %v1165 = vand.u32 %v111, 4294901760
    %1166 = vmatpush1.msra.mxu0 %v1165
    %1167 = vmatprep.subr.mxu0 0.0
    %v1168 = vand.u32 %v110, 4294901760
    %1169 = vmatpush1.msra.mxu0 %v1168
    %1170 = vmatprep.subr.mxu0 0.0
    %v1171 = vand.u32 %v109, 4294901760
    %1172 = vmatpush1.msra.mxu0 %v1171
    %1173 = vmatprep.subr.mxu0 0.0
    %v1174 = vand.u32 %v108, 4294901760
    %1175 = vmatpush1.msra.mxu0 %v1174
    %1176 = vmatprep.subr.mxu0 0.0
    %v1177 = vand.u32 %v107, 4294901760
    %1178 = vmatpush1.msra.mxu0 %v1177
    %1179 = vmatprep.subr.mxu0 0.0
    %v1180 = vand.u32 %v106, 4294901760
    %1181 = vmatpush1.msra.mxu0 %v1180
    %1182 = vmatprep.subr.mxu0 0.0
    %v1183 = vand.u32 %v105, 4294901760
    %1184 = vmatpush1.msra.mxu0 %v1183
    %1185 = vmatprep.subr.mxu0 0.0
    %v1186 = vand.u32 %v104, 4294901760
    %1187 = vmatpush1.msra.mxu0 %v1186
    %1188 = vmatprep.subr.mxu0 0.0
    %v1189 = vand.u32 %v103, 4294901760
    %1190 = vmatpush1.msra.mxu0 %v1189
    %1191 = vmatprep.subr.mxu0 0.0
    %v1192 = vand.u32 %v102, 4294901760
    %1193 = vmatpush1.msra.mxu0 %v1192
    %1194 = vmatprep.subr.mxu0 0.0
    %v1195 = vand.u32 %v101, 4294901760
    %1196 = vmatpush1.msra.mxu0 %v1195
    %1197 = vmatprep.subr.mxu0 0.0
    %v1198 = vand.u32 %v100, 4294901760
    %1199 = vmatpush1.msra.mxu0 %v1198
    %1200 = vmatprep.subr.mxu0 0.0
    %v1201 = vand.u32 %v99, 4294901760
    %1202 = vmatpush1.msra.mxu0 %v1201
    %1203 = vmatprep.subr.mxu0 0.0
    %v1204 = vand.u32 %v98, 4294901760
    %1205 = vmatpush1.msra.mxu0 %v1204
    %1206 = vmatprep.subr.mxu0 0.0
    %v1207 = vand.u32 %v97, 4294901760
    %1208 = vmatpush1.msra.mxu0 %v1207
    %1209 = vmatprep.subr.mxu0 0.0
    %1210 = vmatpush2.msra.mxu0 0.0
    %1211 = vmatprep.subr.mxu0 0.0
    %1212 = vmatpush2.msra.mxu0 0.0
    %1213 = vmatprep.subr.mxu0 0.0
    %1214 = vmatpush2.msra.mxu0 0.0
    %1215 = vmatprep.subr.mxu0 0.0
    %1216 = vmatpush2.msra.mxu0 0.0
    %1217 = vmatprep.subr.mxu0 0.0
    %1218 = vmatpush2.msra.mxu0 0.0
    %1219 = vmatprep.subr.mxu0 0.0
    %1220 = vmatpush2.msra.mxu0 0.0
    %1221 = vmatprep.subr.mxu0 0.0
    %1222 = vmatpush2.msra.mxu0 0.0
    %1223 = vmatprep.subr.mxu0 0.0
    %1224 = vmatpush2.msra.mxu0 0.0
    %1225 = vmatprep.subr.mxu0 0.0
    %1226 = vmatpush2.msra.mxu0 0.0
    %1227 = vmatprep.subr.mxu0 0.0
    %1228 = vmatpush2.msra.mxu0 0.0
    %1229 = vmatprep.subr.mxu0 0.0
    %1230 = vmatpush2.msra.mxu0 0.0
    %1231 = vmatprep.subr.mxu0 0.0
    %1232 = vmatpush2.msra.mxu0 0.0
    %1233 = vmatprep.subr.mxu0 0.0
    %1234 = vmatpush2.msra.mxu0 0.0
    %1235 = vmatprep.subr.mxu0 0.0
    %1236 = vmatpush2.msra.mxu0 0.0
    %1237 = vmatprep.subr.mxu0 0.0
    %1238 = vmatpush2.msra.mxu0 0.0
    %1239 = vmatprep.subr.mxu0 0.0
    %1240 = vmatpush2.msra.mxu0 0.0
    %1241 = vmatprep.mubr.f32.mxu0 0.0
    %v1242 = vand.u32 %v96, 4294901760
    %1243 = vmatmul.mubr.f32.gmra.mxu0 %v1242
    %v1244 = vpop.f32.mrf.mxu0
    %v1245 = vadd.f32 %v1158, %v1244
    %v1246 = vpop.f32.mrf.mxu0
    %1247 = vdwg.mxu0
    %v1248 = vtanh.pop %v1245
    %vm1249 = vcmask 253952
    %1250 = vst.msk [vmem:[#allocation11] sm:$0x1] %vm1249, %v1248
    %v1251 = vld [vmem:[#allocation8] sm:$0xff]
    %v1252 = vld [vmem:[#allocation8 + $0x8] sm:$0xff]
    %v1253 = vld [vmem:[#allocation8 + $0x10] sm:$0xff]
    %v1254 = vld [vmem:[#allocation8 + $0x18] sm:$0xff]
    %v1256 = vsel %vm118, %v1248, 0
    %1258 = vmatprep.subr.mxu0 0.0
    %1259 = vmatpush1.msra.mxu0 0.0
    %1260 = vmatprep.subr.mxu0 0.0
    %1261 = vmatpush1.msra.mxu0 0.0
    %1262 = vmatprep.subr.mxu0 0.0
    %1263 = vmatpush1.msra.mxu0 0.0
    %1264 = vmatprep.subr.mxu0 0.0
    %1265 = vmatpush1.msra.mxu0 0.0
    %1266 = vmatprep.subr.mxu0 0.0
    %1267 = vmatpush1.msra.mxu0 0.0
    %1268 = vmatprep.subr.mxu0 0.0
    %1269 = vmatpush1.msra.mxu0 0.0
    %1270 = vmatprep.subr.mxu0 0.0
    %1271 = vmatpush1.msra.mxu0 0.0
    %1272 = vmatprep.subr.mxu0 0.0
    %1273 = vmatpush1.msra.mxu0 0.0
    %1274 = vmatprep.subr.mxu0 0.0
    %1275 = vmatpush1.msra.mxu0 0.0
    %1276 = vmatprep.subr.mxu0 0.0
    %1277 = vmatpush1.msra.mxu0 0.0
    %1278 = vmatprep.subr.mxu0 0.0
    %1279 = vmatpush1.msra.mxu0 0.0
    %1280 = vmatprep.subr.mxu0 0.0
    %1281 = vmatpush1.msra.mxu0 0.0
    %1282 = vmatprep.subr.mxu0 0.0
    %v1283 = vand.u32 %v1254, 4294901760
    %1284 = vmatpush1.msra.mxu0 %v1283
    %1285 = vmatprep.subr.mxu0 0.0
    %v1286 = vand.u32 %v1253, 4294901760
    %1287 = vmatpush1.msra.mxu0 %v1286
    %1288 = vmatprep.subr.mxu0 0.0
    %v1289 = vand.u32 %v1252, 4294901760
    %1290 = vmatpush1.msra.mxu0 %v1289
    %1291 = vmatprep.subr.mxu0 0.0
    %v1292 = vand.u32 %v1251, 4294901760
    %1293 = vmatpush1.msra.mxu0 %v1292
    %1294 = vmatprep.subr.mxu0 0.0
    %1295 = vmatpush2.msra.mxu0 0.0
    %1296 = vmatprep.subr.mxu0 0.0
    %1297 = vmatpush2.msra.mxu0 0.0
    %1298 = vmatprep.subr.mxu0 0.0
    %1299 = vmatpush2.msra.mxu0 0.0
    %1300 = vmatprep.subr.mxu0 0.0
    %1301 = vmatpush2.msra.mxu0 0.0
    %1302 = vmatprep.subr.mxu0 0.0
    %1303 = vmatpush2.msra.mxu0 0.0
    %1304 = vmatprep.subr.mxu0 0.0
    %1305 = vmatpush2.msra.mxu0 0.0
    %1306 = vmatprep.subr.mxu0 0.0
    %1307 = vmatpush2.msra.mxu0 0.0
    %1308 = vmatprep.subr.mxu0 0.0
    %1309 = vmatpush2.msra.mxu0 0.0
    %1310 = vmatprep.subr.mxu0 0.0
    %1311 = vmatpush2.msra.mxu0 0.0
    %1312 = vmatprep.subr.mxu0 0.0
    %1313 = vmatpush2.msra.mxu0 0.0
    %1314 = vmatprep.subr.mxu0 0.0
    %1315 = vmatpush2.msra.mxu0 0.0
    %1316 = vmatprep.subr.mxu0 0.0
    %1317 = vmatpush2.msra.mxu0 0.0
    %1318 = vmatprep.subr.mxu0 0.0
    %1319 = vmatpush2.msra.mxu0 0.0
    %1320 = vmatprep.subr.mxu0 0.0
    %1321 = vmatpush2.msra.mxu0 0.0
    %1322 = vmatprep.subr.mxu0 0.0
    %1323 = vmatpush2.msra.mxu0 0.0
    %1324 = vmatprep.subr.mxu0 0.0
    %1325 = vmatpush2.msra.mxu0 0.0
    %1326 = vmatprep.mubr.f32.mxu0 0.0
    %v1327 = vand.u32 %v1256, 4294901760
    %v1328 = vsub.f32 %v1256, %v1327
    %v1329 = vand.u32 %v1328, 4294901760
    %v1330 = vsub.f32 %v1328, %v1329
    %v1331 = vand.u32 %v1330, 4294901760
    %1332 = vmatmul.mubr.f32.gmra.mxu0 %v1331
    %v1333 = vpop.f32.mrf.mxu0
    %v1334 = vadd.f32 0.0, %v1333
    %v1335 = vpop.f32.mrf.mxu0
    %1336 = vdwg.mxu0
    %1337 = vmatprep.subr.mxu0 0.0
    %1338 = vmatpush1.msra.mxu0 0.0
    %1339 = vmatprep.subr.mxu0 0.0
    %1340 = vmatpush1.msra.mxu0 0.0
    %1341 = vmatprep.subr.mxu0 0.0
    %1342 = vmatpush1.msra.mxu0 0.0
    %1343 = vmatprep.subr.mxu0 0.0
    %1344 = vmatpush1.msra.mxu0 0.0
    %1345 = vmatprep.subr.mxu0 0.0
    %1346 = vmatpush1.msra.mxu0 0.0
    %1347 = vmatprep.subr.mxu0 0.0
    %1348 = vmatpush1.msra.mxu0 0.0
    %1349 = vmatprep.subr.mxu0 0.0
    %1350 = vmatpush1.msra.mxu0 0.0
    %1351 = vmatprep.subr.mxu0 0.0
    %1352 = vmatpush1.msra.mxu0 0.0
    %1353 = vmatprep.subr.mxu0 0.0
    %1354 = vmatpush1.msra.mxu0 0.0
    %1355 = vmatprep.subr.mxu0 0.0
    %1356 = vmatpush1.msra.mxu0 0.0
    %1357 = vmatprep.subr.mxu0 0.0
    %1358 = vmatpush1.msra.mxu0 0.0
    %1359 = vmatprep.subr.mxu0 0.0
    %1360 = vmatpush1.msra.mxu0 0.0
    %1361 = vmatprep.subr.mxu0 0.0
    %v1362 = vand.u32 %v1254, 4294901760
    %v1363 = vsub.f32 %v1254, %v1362
    %v1364 = vand.u32 %v1363, 4294901760
    %v1365 = vsub.f32 %v1363, %v1364
    %v1366 = vand.u32 %v1365, 4294901760
    %1367 = vmatpush1.msra.mxu0 %v1366
    %1368 = vmatprep.subr.mxu0 0.0
    %v1369 = vand.u32 %v1253, 4294901760
    %v1370 = vsub.f32 %v1253, %v1369
    %v1371 = vand.u32 %v1370, 4294901760
    %v1372 = vsub.f32 %v1370, %v1371
    %v1373 = vand.u32 %v1372, 4294901760
    %1374 = vmatpush1.msra.mxu0 %v1373
    %1375 = vmatprep.subr.mxu0 0.0
    %v1376 = vand.u32 %v1252, 4294901760
    %v1377 = vsub.f32 %v1252, %v1376
    %v1378 = vand.u32 %v1377, 4294901760
    %v1379 = vsub.f32 %v1377, %v1378
    %v1380 = vand.u32 %v1379, 4294901760
    %1381 = vmatpush1.msra.mxu0 %v1380
    %1382 = vmatprep.subr.mxu0 0.0
    %v1383 = vand.u32 %v1251, 4294901760
    %v1384 = vsub.f32 %v1251, %v1383
    %v1385 = vand.u32 %v1384, 4294901760
    %v1386 = vsub.f32 %v1384, %v1385
    %v1387 = vand.u32 %v1386, 4294901760
    %1388 = vmatpush1.msra.mxu0 %v1387
    %1389 = vmatprep.subr.mxu0 0.0
    %1390 = vmatpush2.msra.mxu0 0.0
    %1391 = vmatprep.subr.mxu0 0.0
    %1392 = vmatpush2.msra.mxu0 0.0
    %1393 = vmatprep.subr.mxu0 0.0
    %1394 = vmatpush2.msra.mxu0 0.0
    %1395 = vmatprep.subr.mxu0 0.0
    %1396 = vmatpush2.msra.mxu0 0.0
    %1397 = vmatprep.subr.mxu0 0.0
    %1398 = vmatpush2.msra.mxu0 0.0
    %1399 = vmatprep.subr.mxu0 0.0
    %1400 = vmatpush2.msra.mxu0 0.0
    %1401 = vmatprep.subr.mxu0 0.0
    %1402 = vmatpush2.msra.mxu0 0.0
    %1403 = vmatprep.subr.mxu0 0.0
    %1404 = vmatpush2.msra.mxu0 0.0
    %1405 = vmatprep.subr.mxu0 0.0
    %1406 = vmatpush2.msra.mxu0 0.0
    %1407 = vmatprep.subr.mxu0 0.0
    %1408 = vmatpush2.msra.mxu0 0.0
    %1409 = vmatprep.subr.mxu0 0.0
    %1410 = vmatpush2.msra.mxu0 0.0
    %1411 = vmatprep.subr.mxu0 0.0
    %1412 = vmatpush2.msra.mxu0 0.0
    %1413 = vmatprep.subr.mxu0 0.0
    %1414 = vmatpush2.msra.mxu0 0.0
    %1415 = vmatprep.subr.mxu0 0.0
    %1416 = vmatpush2.msra.mxu0 0.0
    %1417 = vmatprep.subr.mxu0 0.0
    %1418 = vmatpush2.msra.mxu0 0.0
    %1419 = vmatprep.subr.mxu0 0.0
    %1420 = vmatpush2.msra.mxu0 0.0
    %1421 = vmatprep.mubr.f32.mxu0 0.0
    %v1422 = vand.u32 %v1256, 4294901760
    %1423 = vmatmul.mubr.f32.gmra.mxu0 %v1422
    %v1424 = vpop.f32.mrf.mxu0
    %v1425 = vadd.f32 %v1334, %v1424
    %v1426 = vpop.f32.mrf.mxu0
    %1427 = vdwg.mxu0
    %1428 = vmatprep.subr.mxu0 0.0
    %1429 = vmatpush1.msra.mxu0 0.0
    %1430 = vmatprep.subr.mxu0 0.0
    %1431 = vmatpush1.msra.mxu0 0.0
    %1432 = vmatprep.subr.mxu0 0.0
    %1433 = vmatpush1.msra.mxu0 0.0
    %1434 = vmatprep.subr.mxu0 0.0
    %1435 = vmatpush1.msra.mxu0 0.0
    %1436 = vmatprep.subr.mxu0 0.0
    %1437 = vmatpush1.msra.mxu0 0.0
    %1438 = vmatprep.subr.mxu0 0.0
    %1439 = vmatpush1.msra.mxu0 0.0
    %1440 = vmatprep.subr.mxu0 0.0
    %1441 = vmatpush1.msra.mxu0 0.0
    %1442 = vmatprep.subr.mxu0 0.0
    %1443 = vmatpush1.msra.mxu0 0.0
    %1444 = vmatprep.subr.mxu0 0.0
    %1445 = vmatpush1.msra.mxu0 0.0
    %1446 = vmatprep.subr.mxu0 0.0
    %1447 = vmatpush1.msra.mxu0 0.0
    %1448 = vmatprep.subr.mxu0 0.0
    %1449 = vmatpush1.msra.mxu0 0.0
    %1450 = vmatprep.subr.mxu0 0.0
    %1451 = vmatpush1.msra.mxu0 0.0
    %1452 = vmatprep.subr.mxu0 0.0
    %v1453 = vand.u32 %v1254, 4294901760
    %v1454 = vsub.f32 %v1254, %v1453
    %1455 = vmatpush1.msra.mxu0 %v1454
    %1456 = vmatprep.subr.mxu0 0.0
    %v1457 = vand.u32 %v1253, 4294901760
    %v1458 = vsub.f32 %v1253, %v1457
    %1459 = vmatpush1.msra.mxu0 %v1458
    %1460 = vmatprep.subr.mxu0 0.0
    %v1461 = vand.u32 %v1252, 4294901760
    %v1462 = vsub.f32 %v1252, %v1461
    %1463 = vmatpush1.msra.mxu0 %v1462
    %1464 = vmatprep.subr.mxu0 0.0
    %v1465 = vand.u32 %v1251, 4294901760
    %v1466 = vsub.f32 %v1251, %v1465
    %1467 = vmatpush1.msra.mxu0 %v1466
    %1468 = vmatprep.subr.mxu0 0.0
    %1469 = vmatpush2.msra.mxu0 0.0
    %1470 = vmatprep.subr.mxu0 0.0
    %1471 = vmatpush2.msra.mxu0 0.0
    %1472 = vmatprep.subr.mxu0 0.0
    %1473 = vmatpush2.msra.mxu0 0.0
    %1474 = vmatprep.subr.mxu0 0.0
    %1475 = vmatpush2.msra.mxu0 0.0
    %1476 = vmatprep.subr.mxu0 0.0
    %1477 = vmatpush2.msra.mxu0 0.0
    %1478 = vmatprep.subr.mxu0 0.0
    %1479 = vmatpush2.msra.mxu0 0.0
    %1480 = vmatprep.subr.mxu0 0.0
    %1481 = vmatpush2.msra.mxu0 0.0
    %1482 = vmatprep.subr.mxu0 0.0
    %1483 = vmatpush2.msra.mxu0 0.0
    %1484 = vmatprep.subr.mxu0 0.0
    %1485 = vmatpush2.msra.mxu0 0.0
    %1486 = vmatprep.subr.mxu0 0.0
    %1487 = vmatpush2.msra.mxu0 0.0
    %1488 = vmatprep.subr.mxu0 0.0
    %1489 = vmatpush2.msra.mxu0 0.0
    %1490 = vmatprep.subr.mxu0 0.0
    %1491 = vmatpush2.msra.mxu0 0.0
    %1492 = vmatprep.subr.mxu0 0.0
    %1493 = vmatpush2.msra.mxu0 0.0
    %1494 = vmatprep.subr.mxu0 0.0
    %1495 = vmatpush2.msra.mxu0 0.0
    %1496 = vmatprep.subr.mxu0 0.0
    %1497 = vmatpush2.msra.mxu0 0.0
    %1498 = vmatprep.subr.mxu0 0.0
    %1499 = vmatpush2.msra.mxu0 0.0
    %1500 = vmatprep.mubr.f32.mxu0 0.0
    %v1501 = vand.u32 %v1256, 4294901760
    %v1502 = vsub.f32 %v1256, %v1501
    %1503 = vmatmul.mubr.f32.gmra.mxu0 %v1502
    %v1504 = vpop.f32.mrf.mxu0
    %v1505 = vadd.f32 %v1425, %v1504
    %v1506 = vpop.f32.mrf.mxu0
    %1507 = vdwg.mxu0
    %1508 = vmatprep.subr.mxu0 0.0
    %1509 = vmatpush1.msra.mxu0 0.0
    %1510 = vmatprep.subr.mxu0 0.0
    %1511 = vmatpush1.msra.mxu0 0.0
    %1512 = vmatprep.subr.mxu0 0.0
    %1513 = vmatpush1.msra.mxu0 0.0
    %1514 = vmatprep.subr.mxu0 0.0
    %1515 = vmatpush1.msra.mxu0 0.0
    %1516 = vmatprep.subr.mxu0 0.0
    %1517 = vmatpush1.msra.mxu0 0.0
    %1518 = vmatprep.subr.mxu0 0.0
    %1519 = vmatpush1.msra.mxu0 0.0
    %1520 = vmatprep.subr.mxu0 0.0
    %1521 = vmatpush1.msra.mxu0 0.0
    %1522 = vmatprep.subr.mxu0 0.0
    %1523 = vmatpush1.msra.mxu0 0.0
    %1524 = vmatprep.subr.mxu0 0.0
    %1525 = vmatpush1.msra.mxu0 0.0
    %1526 = vmatprep.subr.mxu0 0.0
    %1527 = vmatpush1.msra.mxu0 0.0
    %1528 = vmatprep.subr.mxu0 0.0
    %1529 = vmatpush1.msra.mxu0 0.0
    %1530 = vmatprep.subr.mxu0 0.0
    %1531 = vmatpush1.msra.mxu0 0.0
    %1532 = vmatprep.subr.mxu0 0.0
    %v1533 = vand.u32 %v1254, 4294901760
    %1534 = vmatpush1.msra.mxu0 %v1533
    %1535 = vmatprep.subr.mxu0 0.0
    %v1536 = vand.u32 %v1253, 4294901760
    %1537 = vmatpush1.msra.mxu0 %v1536
    %1538 = vmatprep.subr.mxu0 0.0
    %v1539 = vand.u32 %v1252, 4294901760
    %1540 = vmatpush1.msra.mxu0 %v1539
    %1541 = vmatprep.subr.mxu0 0.0
    %v1542 = vand.u32 %v1251, 4294901760
    %1543 = vmatpush1.msra.mxu0 %v1542
    %1544 = vmatprep.subr.mxu0 0.0
    %1545 = vmatpush2.msra.mxu0 0.0
    %1546 = vmatprep.subr.mxu0 0.0
    %1547 = vmatpush2.msra.mxu0 0.0
    %1548 = vmatprep.subr.mxu0 0.0
    %1549 = vmatpush2.msra.mxu0 0.0
    %1550 = vmatprep.subr.mxu0 0.0
    %1551 = vmatpush2.msra.mxu0 0.0
    %1552 = vmatprep.subr.mxu0 0.0
    %1553 = vmatpush2.msra.mxu0 0.0
    %1554 = vmatprep.subr.mxu0 0.0
    %1555 = vmatpush2.msra.mxu0 0.0
    %1556 = vmatprep.subr.mxu0 0.0
    %1557 = vmatpush2.msra.mxu0 0.0
    %1558 = vmatprep.subr.mxu0 0.0
    %1559 = vmatpush2.msra.mxu0 0.0
    %1560 = vmatprep.subr.mxu0 0.0
    %1561 = vmatpush2.msra.mxu0 0.0
    %1562 = vmatprep.subr.mxu0 0.0
    %1563 = vmatpush2.msra.mxu0 0.0
    %1564 = vmatprep.subr.mxu0 0.0
    %1565 = vmatpush2.msra.mxu0 0.0
    %1566 = vmatprep.subr.mxu0 0.0
    %1567 = vmatpush2.msra.mxu0 0.0
    %1568 = vmatprep.subr.mxu0 0.0
    %1569 = vmatpush2.msra.mxu0 0.0
    %1570 = vmatprep.subr.mxu0 0.0
    %1571 = vmatpush2.msra.mxu0 0.0
    %1572 = vmatprep.subr.mxu0 0.0
    %1573 = vmatpush2.msra.mxu0 0.0
    %1574 = vmatprep.subr.mxu0 0.0
    %1575 = vmatpush2.msra.mxu0 0.0
    %1576 = vmatprep.mubr.f32.mxu0 0.0
    %v1577 = vand.u32 %v1256, 4294901760
    %v1578 = vsub.f32 %v1256, %v1577
    %v1579 = vand.u32 %v1578, 4294901760
    %1580 = vmatmul.mubr.f32.gmra.mxu0 %v1579
    %v1581 = vpop.f32.mrf.mxu0
    %v1582 = vadd.f32 %v1505, %v1581
    %v1583 = vpop.f32.mrf.mxu0
    %1584 = vdwg.mxu0
    %1585 = vmatprep.subr.mxu0 0.0
    %1586 = vmatpush1.msra.mxu0 0.0
    %1587 = vmatprep.subr.mxu0 0.0
    %1588 = vmatpush1.msra.mxu0 0.0
    %1589 = vmatprep.subr.mxu0 0.0
    %1590 = vmatpush1.msra.mxu0 0.0
    %1591 = vmatprep.subr.mxu0 0.0
    %1592 = vmatpush1.msra.mxu0 0.0
    %1593 = vmatprep.subr.mxu0 0.0
    %1594 = vmatpush1.msra.mxu0 0.0
    %1595 = vmatprep.subr.mxu0 0.0
    %1596 = vmatpush1.msra.mxu0 0.0
    %1597 = vmatprep.subr.mxu0 0.0
    %1598 = vmatpush1.msra.mxu0 0.0
    %1599 = vmatprep.subr.mxu0 0.0
    %1600 = vmatpush1.msra.mxu0 0.0
    %1601 = vmatprep.subr.mxu0 0.0
    %1602 = vmatpush1.msra.mxu0 0.0
    %1603 = vmatprep.subr.mxu0 0.0
    %1604 = vmatpush1.msra.mxu0 0.0
    %1605 = vmatprep.subr.mxu0 0.0
    %1606 = vmatpush1.msra.mxu0 0.0
    %1607 = vmatprep.subr.mxu0 0.0
    %1608 = vmatpush1.msra.mxu0 0.0
    %1609 = vmatprep.subr.mxu0 0.0
    %v1610 = vand.u32 %v1254, 4294901760
    %v1611 = vsub.f32 %v1254, %v1610
    %v1612 = vand.u32 %v1611, 4294901760
    %1613 = vmatpush1.msra.mxu0 %v1612
    %1614 = vmatprep.subr.mxu0 0.0
    %v1615 = vand.u32 %v1253, 4294901760
    %v1616 = vsub.f32 %v1253, %v1615
    %v1617 = vand.u32 %v1616, 4294901760
    %1618 = vmatpush1.msra.mxu0 %v1617
    %1619 = vmatprep.subr.mxu0 0.0
    %v1620 = vand.u32 %v1252, 4294901760
    %v1621 = vsub.f32 %v1252, %v1620
    %v1622 = vand.u32 %v1621, 4294901760
    %1623 = vmatpush1.msra.mxu0 %v1622
    %1624 = vmatprep.subr.mxu0 0.0
    %v1625 = vand.u32 %v1251, 4294901760
    %v1626 = vsub.f32 %v1251, %v1625
    %v1627 = vand.u32 %v1626, 4294901760
    %1628 = vmatpush1.msra.mxu0 %v1627
    %1629 = vmatprep.subr.mxu0 0.0
    %1630 = vmatpush2.msra.mxu0 0.0
    %1631 = vmatprep.subr.mxu0 0.0
    %1632 = vmatpush2.msra.mxu0 0.0
    %1633 = vmatprep.subr.mxu0 0.0
    %1634 = vmatpush2.msra.mxu0 0.0
    %1635 = vmatprep.subr.mxu0 0.0
    %1636 = vmatpush2.msra.mxu0 0.0
    %1637 = vmatprep.subr.mxu0 0.0
    %1638 = vmatpush2.msra.mxu0 0.0
    %1639 = vmatprep.subr.mxu0 0.0
    %1640 = vmatpush2.msra.mxu0 0.0
    %1641 = vmatprep.subr.mxu0 0.0
    %1642 = vmatpush2.msra.mxu0 0.0
    %1643 = vmatprep.subr.mxu0 0.0
    %1644 = vmatpush2.msra.mxu0 0.0
    %1645 = vmatprep.subr.mxu0 0.0
    %1646 = vmatpush2.msra.mxu0 0.0
    %1647 = vmatprep.subr.mxu0 0.0
    %1648 = vmatpush2.msra.mxu0 0.0
    %1649 = vmatprep.subr.mxu0 0.0
    %1650 = vmatpush2.msra.mxu0 0.0
    %1651 = vmatprep.subr.mxu0 0.0
    %1652 = vmatpush2.msra.mxu0 0.0
    %1653 = vmatprep.subr.mxu0 0.0
    %1654 = vmatpush2.msra.mxu0 0.0
    %1655 = vmatprep.subr.mxu0 0.0
    %1656 = vmatpush2.msra.mxu0 0.0
    %1657 = vmatprep.subr.mxu0 0.0
    %1658 = vmatpush2.msra.mxu0 0.0
    %1659 = vmatprep.subr.mxu0 0.0
    %1660 = vmatpush2.msra.mxu0 0.0
    %1661 = vmatprep.mubr.f32.mxu0 0.0
    %v1662 = vand.u32 %v1256, 4294901760
    %1663 = vmatmul.mubr.f32.gmra.mxu0 %v1662
    %v1664 = vpop.f32.mrf.mxu0
    %v1665 = vadd.f32 %v1582, %v1664
    %v1666 = vpop.f32.mrf.mxu0
    %1667 = vdwg.mxu0
    %1668 = vmatprep.subr.mxu0 0.0
    %1669 = vmatpush1.msra.mxu0 0.0
    %1670 = vmatprep.subr.mxu0 0.0
    %1671 = vmatpush1.msra.mxu0 0.0
    %1672 = vmatprep.subr.mxu0 0.0
    %1673 = vmatpush1.msra.mxu0 0.0
    %1674 = vmatprep.subr.mxu0 0.0
    %1675 = vmatpush1.msra.mxu0 0.0
    %1676 = vmatprep.subr.mxu0 0.0
    %1677 = vmatpush1.msra.mxu0 0.0
    %1678 = vmatprep.subr.mxu0 0.0
    %1679 = vmatpush1.msra.mxu0 0.0
    %1680 = vmatprep.subr.mxu0 0.0
    %1681 = vmatpush1.msra.mxu0 0.0
    %1682 = vmatprep.subr.mxu0 0.0
    %1683 = vmatpush1.msra.mxu0 0.0
    %1684 = vmatprep.subr.mxu0 0.0
    %1685 = vmatpush1.msra.mxu0 0.0
    %1686 = vmatprep.subr.mxu0 0.0
    %1687 = vmatpush1.msra.mxu0 0.0
    %1688 = vmatprep.subr.mxu0 0.0
    %1689 = vmatpush1.msra.mxu0 0.0
    %1690 = vmatprep.subr.mxu0 0.0
    %1691 = vmatpush1.msra.mxu0 0.0
    %1692 = vmatprep.subr.mxu0 0.0
    %v1693 = vand.u32 %v1254, 4294901760
    %1694 = vmatpush1.msra.mxu0 %v1693
    %1695 = vmatprep.subr.mxu0 0.0
    %v1696 = vand.u32 %v1253, 4294901760
    %1697 = vmatpush1.msra.mxu0 %v1696
    %1698 = vmatprep.subr.mxu0 0.0
    %v1699 = vand.u32 %v1252, 4294901760
    %1700 = vmatpush1.msra.mxu0 %v1699
    %1701 = vmatprep.subr.mxu0 0.0
    %v1702 = vand.u32 %v1251, 4294901760
    %1703 = vmatpush1.msra.mxu0 %v1702
    %1704 = vmatprep.subr.mxu0 0.0
    %1705 = vmatpush2.msra.mxu0 0.0
    %1706 = vmatprep.subr.mxu0 0.0
    %1707 = vmatpush2.msra.mxu0 0.0
    %1708 = vmatprep.subr.mxu0 0.0
    %1709 = vmatpush2.msra.mxu0 0.0
    %1710 = vmatprep.subr.mxu0 0.0
    %1711 = vmatpush2.msra.mxu0 0.0
    %1712 = vmatprep.subr.mxu0 0.0
    %1713 = vmatpush2.msra.mxu0 0.0
    %1714 = vmatprep.subr.mxu0 0.0
    %1715 = vmatpush2.msra.mxu0 0.0
    %1716 = vmatprep.subr.mxu0 0.0
    %1717 = vmatpush2.msra.mxu0 0.0
    %1718 = vmatprep.subr.mxu0 0.0
    %1719 = vmatpush2.msra.mxu0 0.0
    %1720 = vmatprep.subr.mxu0 0.0
    %1721 = vmatpush2.msra.mxu0 0.0
    %1722 = vmatprep.subr.mxu0 0.0
    %1723 = vmatpush2.msra.mxu0 0.0
    %1724 = vmatprep.subr.mxu0 0.0
    %1725 = vmatpush2.msra.mxu0 0.0
    %1726 = vmatprep.subr.mxu0 0.0
    %1727 = vmatpush2.msra.mxu0 0.0
    %1728 = vmatprep.subr.mxu0 0.0
    %1729 = vmatpush2.msra.mxu0 0.0
    %1730 = vmatprep.subr.mxu0 0.0
    %1731 = vmatpush2.msra.mxu0 0.0
    %1732 = vmatprep.subr.mxu0 0.0
    %1733 = vmatpush2.msra.mxu0 0.0
    %1734 = vmatprep.subr.mxu0 0.0
    %1735 = vmatpush2.msra.mxu0 0.0
    %1736 = vmatprep.mubr.f32.mxu0 0.0
    %v1737 = vand.u32 %v1256, 4294901760
    %1738 = vmatmul.mubr.f32.gmra.mxu0 %v1737
    %v1739 = vpop.f32.mrf.mxu0
    %v1740 = vadd.f32 %v1665, %v1739
    %v1741 = vpop.f32.mrf.mxu0
    %1742 = vdwg.mxu0
    %v1743 = vld [vmem:[%s5] sm:$0x1]
    %vm1744 = vcmp.gt.f32.partialorder %v1743, 0.0
    %v1745 = vsel %vm1744, %v1740, -1e+30
    %vm1746 = vcmask 1040384
    %v1747 = vsel %vm1746, %v1745, -inf
    %1748 = vmax.xlane.f32.xlu0 %v1747
    %v1749 = vpop.xlane.xlu0 %1748
    %v1750 = vsub.f32 %v1745, %v1749
    %v1751 = vmul.f32 %v1750, 1.442695
    %v1752 = vpow.pop %v1751
    %v1753 = vmul.f32 %v1752, %v1743
    %v1754 = vsel %vm1746, %v1753, 0.0
    %1755 = vadd.xlane.f32.xlu0 %v1754
    %v1756 = vpop.xlane.xlu0 %1755
    %v1757 = vrcp.pop %v1756
    %v1758 = vmul.f32 %v1753, %v1757
    %v1759 = vld [vmem:[#allocation9] sm:$0xff]
    %v1760 = vld [vmem:[#allocation9 + $0x8] sm:$0xff]
    %v1761 = vld [vmem:[#allocation9 + $0x10] sm:$0xff]
    %v1762 = vld [vmem:[#allocation9 + $0x18] sm:$0xff]
    %v1763 = vld [vmem:[#allocation9 + $0x20] sm:$0xff]
    %v1764 = vld [vmem:[#allocation9 + $0x28] sm:$0xff]
    %v1765 = vld [vmem:[#allocation9 + $0x30] sm:$0xff]
    %v1766 = vld [vmem:[#allocation9 + $0x38] sm:$0xff]
    %v1767 = vld [vmem:[#allocation9 + $0x40] sm:$0xff]
    %v1768 = vld [vmem:[#allocation9 + $0x48] sm:$0xff]
    %v1769 = vld [vmem:[#allocation9 + $0x50] sm:$0xff]
    %v1770 = vld [vmem:[#allocation9 + $0x58] sm:$0xff]
    %v1771 = vld [vmem:[#allocation9 + $0x60] sm:$0xff]
    %v1772 = vld [vmem:[#allocation9 + $0x68] sm:$0xff]
    %v1773 = vld [vmem:[#allocation9 + $0x70] sm:$0xff]
    %v1774 = vld [vmem:[#allocation9 + $0x78] sm:$0xff]
    %v1775 = vld [vmem:[#allocation9 + $0x80] sm:$0xff]
    %v1776 = vld [vmem:[#allocation9 + $0x88] sm:$0xff]
    %v1777 = vld [vmem:[#allocation9 + $0x90] sm:$0xff]
    %v1778 = vld [vmem:[#allocation9 + $0x98] sm:$0xff]
    %v1779 = vld [vmem:[#allocation9 + $0xa0] sm:$0xff]
    %v1780 = vld [vmem:[#allocation9 + $0xa8] sm:$0xff]
    %v1781 = vld [vmem:[#allocation9 + $0xb0] sm:$0xff]
    %v1782 = vld [vmem:[#allocation9 + $0xb8] sm:$0xff]
    %v1783 = vld [vmem:[#allocation9 + $0xc0] sm:$0xff]
    %v1784 = vld [vmem:[#allocation9 + $0xc8] sm:$0xff]
    %v1785 = vld [vmem:[#allocation9 + $0xd0] sm:$0xff]
    %v1786 = vld [vmem:[#allocation9 + $0xd8] sm:$0xff]
    %v1787 = vld [vmem:[#allocation9 + $0xe0] sm:$0xff]
    %v1788 = vld [vmem:[#allocation9 + $0xe8] sm:$0xff]
    %v1789 = vld [vmem:[#allocation9 + $0xf0] sm:$0xff]
    %v1790 = vld [vmem:[#allocation9 + $0xf8] sm:$0xff]
    %v1791 = vand.u32 %v1790, 4294901760
    %1792 = vmatprep.subr.mxu0 %v1791
    %v1793 = vand.u32 %v1789, 4294901760
    %1794 = vmatpush1.msra.mxu0 %v1793
    %v1795 = vand.u32 %v1788, 4294901760
    %1796 = vmatprep.subr.mxu0 %v1795
    %v1797 = vand.u32 %v1787, 4294901760
    %1798 = vmatpush1.msra.mxu0 %v1797
    %v1799 = vand.u32 %v1786, 4294901760
    %1800 = vmatprep.subr.mxu0 %v1799
    %v1801 = vand.u32 %v1785, 4294901760
    %1802 = vmatpush1.msra.mxu0 %v1801
    %v1803 = vand.u32 %v1784, 4294901760
    %1804 = vmatprep.subr.mxu0 %v1803
    %v1805 = vand.u32 %v1783, 4294901760
    %1806 = vmatpush1.msra.mxu0 %v1805
    %v1807 = vand.u32 %v1782, 4294901760
    %1808 = vmatprep.subr.mxu0 %v1807
    %v1809 = vand.u32 %v1781, 4294901760
    %1810 = vmatpush1.msra.mxu0 %v1809
    %v1811 = vand.u32 %v1780, 4294901760
    %1812 = vmatprep.subr.mxu0 %v1811
    %v1813 = vand.u32 %v1779, 4294901760
    %1814 = vmatpush1.msra.mxu0 %v1813
    %v1815 = vand.u32 %v1778, 4294901760
    %1816 = vmatprep.subr.mxu0 %v1815
    %v1817 = vand.u32 %v1777, 4294901760
    %1818 = vmatpush1.msra.mxu0 %v1817
    %v1819 = vand.u32 %v1776, 4294901760
    %1820 = vmatprep.subr.mxu0 %v1819
    %v1821 = vand.u32 %v1775, 4294901760
    %1822 = vmatpush1.msra.mxu0 %v1821
    %v1823 = vand.u32 %v1774, 4294901760
    %1824 = vmatprep.subr.mxu0 %v1823
    %v1825 = vand.u32 %v1773, 4294901760
    %1826 = vmatpush1.msra.mxu0 %v1825
    %v1827 = vand.u32 %v1772, 4294901760
    %1828 = vmatprep.subr.mxu0 %v1827
    %v1829 = vand.u32 %v1771, 4294901760
    %1830 = vmatpush1.msra.mxu0 %v1829
    %v1831 = vand.u32 %v1770, 4294901760
    %1832 = vmatprep.subr.mxu0 %v1831
    %v1833 = vand.u32 %v1769, 4294901760
    %1834 = vmatpush1.msra.mxu0 %v1833
    %v1835 = vand.u32 %v1768, 4294901760
    %1836 = vmatprep.subr.mxu0 %v1835
    %v1837 = vand.u32 %v1767, 4294901760
    %1838 = vmatpush1.msra.mxu0 %v1837
    %v1839 = vand.u32 %v1766, 4294901760
    %1840 = vmatprep.subr.mxu0 %v1839
    %v1841 = vand.u32 %v1765, 4294901760
    %1842 = vmatpush1.msra.mxu0 %v1841
    %v1843 = vand.u32 %v1764, 4294901760
    %1844 = vmatprep.subr.mxu0 %v1843
    %v1845 = vand.u32 %v1763, 4294901760
    %1846 = vmatpush1.msra.mxu0 %v1845
    %v1847 = vand.u32 %v1762, 4294901760
    %1848 = vmatprep.subr.mxu0 %v1847
    %v1849 = vand.u32 %v1761, 4294901760
    %1850 = vmatpush1.msra.mxu0 %v1849
    %v1851 = vand.u32 %v1760, 4294901760
    %1852 = vmatprep.subr.mxu0 %v1851
    %v1853 = vand.u32 %v1759, 4294901760
    %1854 = vmatpush1.msra.mxu0 %v1853
    %1855 = vmatprep.subr.mxu0 0.0
    %1856 = vmatpush2.msra.mxu0 0.0
    %1857 = vmatprep.subr.mxu0 0.0
    %1858 = vmatpush2.msra.mxu0 0.0
    %1859 = vmatprep.subr.mxu0 0.0
    %1860 = vmatpush2.msra.mxu0 0.0
    %1861 = vmatprep.subr.mxu0 0.0
    %1862 = vmatpush2.msra.mxu0 0.0
    %1863 = vmatprep.subr.mxu0 0.0
    %1864 = vmatpush2.msra.mxu0 0.0
    %1865 = vmatprep.subr.mxu0 0.0
    %1866 = vmatpush2.msra.mxu0 0.0
    %1867 = vmatprep.subr.mxu0 0.0
    %1868 = vmatpush2.msra.mxu0 0.0
    %1869 = vmatprep.subr.mxu0 0.0
    %1870 = vmatpush2.msra.mxu0 0.0
    %1871 = vmatprep.subr.mxu0 0.0
    %1872 = vmatpush2.msra.mxu0 0.0
    %1873 = vmatprep.subr.mxu0 0.0
    %1874 = vmatpush2.msra.mxu0 0.0
    %1875 = vmatprep.subr.mxu0 0.0
    %1876 = vmatpush2.msra.mxu0 0.0
    %1877 = vmatprep.subr.mxu0 0.0
    %1878 = vmatpush2.msra.mxu0 0.0
    %1879 = vmatprep.subr.mxu0 0.0
    %1880 = vmatpush2.msra.mxu0 0.0
    %1881 = vmatprep.subr.mxu0 0.0
    %1882 = vmatpush2.msra.mxu0 0.0
    %1883 = vmatprep.subr.mxu0 0.0
    %1884 = vmatpush2.msra.mxu0 0.0
    %1885 = vmatprep.subr.mxu0 0.0
    %1886 = vmatpush2.msra.mxu0 0.0
    %1887 = vmatprep.mubr.f32.mxu0 0.0
    %v1888 = vand.u32 %v1758, 4294901760
    %v1889 = vsub.f32 %v1758, %v1888
    %v1890 = vand.u32 %v1889, 4294901760
    %v1891 = vsub.f32 %v1889, %v1890
    %v1892 = vand.u32 %v1891, 4294901760
    %1893 = vmatmul.mubr.f32.gmra.mxu0 %v1892
    %v1894 = vpop.f32.mrf.mxu0
    %v1895 = vadd.f32 0.0, %v1894
    %v1896 = vpop.f32.mrf.mxu0
    %v1897 = vadd.f32 0.0, %v1896
    %1898 = vdwg.mxu0
    %v1899 = vand.u32 %v1790, 4294901760
    %v1900 = vsub.f32 %v1790, %v1899
    %v1901 = vand.u32 %v1900, 4294901760
    %v1902 = vsub.f32 %v1900, %v1901
    %v1903 = vand.u32 %v1902, 4294901760
    %1904 = vmatprep.subr.mxu0 %v1903
    %v1905 = vand.u32 %v1789, 4294901760
    %v1906 = vsub.f32 %v1789, %v1905
    %v1907 = vand.u32 %v1906, 4294901760
    %v1908 = vsub.f32 %v1906, %v1907
    %v1909 = vand.u32 %v1908, 4294901760
    %1910 = vmatpush1.msra.mxu0 %v1909
    %v1911 = vand.u32 %v1788, 4294901760
    %v1912 = vsub.f32 %v1788, %v1911
    %v1913 = vand.u32 %v1912, 4294901760
    %v1914 = vsub.f32 %v1912, %v1913
    %v1915 = vand.u32 %v1914, 4294901760
    %1916 = vmatprep.subr.mxu0 %v1915
    %v1917 = vand.u32 %v1787, 4294901760
    %v1918 = vsub.f32 %v1787, %v1917
    %v1919 = vand.u32 %v1918, 4294901760
    %v1920 = vsub.f32 %v1918, %v1919
    %v1921 = vand.u32 %v1920, 4294901760
    %1922 = vmatpush1.msra.mxu0 %v1921
    %v1923 = vand.u32 %v1786, 4294901760
    %v1924 = vsub.f32 %v1786, %v1923
    %v1925 = vand.u32 %v1924, 4294901760
    %v1926 = vsub.f32 %v1924, %v1925
    %v1927 = vand.u32 %v1926, 4294901760
    %1928 = vmatprep.subr.mxu0 %v1927
    %v1929 = vand.u32 %v1785, 4294901760
    %v1930 = vsub.f32 %v1785, %v1929
    %v1931 = vand.u32 %v1930, 4294901760
    %v1932 = vsub.f32 %v1930, %v1931
    %v1933 = vand.u32 %v1932, 4294901760
    %1934 = vmatpush1.msra.mxu0 %v1933
    %v1935 = vand.u32 %v1784, 4294901760
    %v1936 = vsub.f32 %v1784, %v1935
    %v1937 = vand.u32 %v1936, 4294901760
    %v1938 = vsub.f32 %v1936, %v1937
    %v1939 = vand.u32 %v1938, 4294901760
    %1940 = vmatprep.subr.mxu0 %v1939
    %v1941 = vand.u32 %v1783, 4294901760
    %v1942 = vsub.f32 %v1783, %v1941
    %v1943 = vand.u32 %v1942, 4294901760
    %v1944 = vsub.f32 %v1942, %v1943
    %v1945 = vand.u32 %v1944, 4294901760
    %1946 = vmatpush1.msra.mxu0 %v1945
    %v1947 = vand.u32 %v1782, 4294901760
    %v1948 = vsub.f32 %v1782, %v1947
    %v1949 = vand.u32 %v1948, 4294901760
    %v1950 = vsub.f32 %v1948, %v1949
    %v1951 = vand.u32 %v1950, 4294901760
    %1952 = vmatprep.subr.mxu0 %v1951
    %v1953 = vand.u32 %v1781, 4294901760
    %v1954 = vsub.f32 %v1781, %v1953
    %v1955 = vand.u32 %v1954, 4294901760
    %v1956 = vsub.f32 %v1954, %v1955
    %v1957 = vand.u32 %v1956, 4294901760
    %1958 = vmatpush1.msra.mxu0 %v1957
    %v1959 = vand.u32 %v1780, 4294901760
    %v1960 = vsub.f32 %v1780, %v1959
    %v1961 = vand.u32 %v1960, 4294901760
    %v1962 = vsub.f32 %v1960, %v1961
    %v1963 = vand.u32 %v1962, 4294901760
    %1964 = vmatprep.subr.mxu0 %v1963
    %v1965 = vand.u32 %v1779, 4294901760
    %v1966 = vsub.f32 %v1779, %v1965
    %v1967 = vand.u32 %v1966, 4294901760
    %v1968 = vsub.f32 %v1966, %v1967
    %v1969 = vand.u32 %v1968, 4294901760
    %1970 = vmatpush1.msra.mxu0 %v1969
    %v1971 = vand.u32 %v1778, 4294901760
    %v1972 = vsub.f32 %v1778, %v1971
    %v1973 = vand.u32 %v1972, 4294901760
    %v1974 = vsub.f32 %v1972, %v1973
    %v1975 = vand.u32 %v1974, 4294901760
    %1976 = vmatprep.subr.mxu0 %v1975
    %v1977 = vand.u32 %v1777, 4294901760
    %v1978 = vsub.f32 %v1777, %v1977
    %v1979 = vand.u32 %v1978, 4294901760
    %v1980 = vsub.f32 %v1978, %v1979
    %v1981 = vand.u32 %v1980, 4294901760
    %1982 = vmatpush1.msra.mxu0 %v1981
    %v1983 = vand.u32 %v1776, 4294901760
    %v1984 = vsub.f32 %v1776, %v1983
    %v1985 = vand.u32 %v1984, 4294901760
    %v1986 = vsub.f32 %v1984, %v1985
    %v1987 = vand.u32 %v1986, 4294901760
    %1988 = vmatprep.subr.mxu0 %v1987
    %v1989 = vand.u32 %v1775, 4294901760
    %v1990 = vsub.f32 %v1775, %v1989
    %v1991 = vand.u32 %v1990, 4294901760
    %v1992 = vsub.f32 %v1990, %v1991
    %v1993 = vand.u32 %v1992, 4294901760
    %1994 = vmatpush1.msra.mxu0 %v1993
    %v1995 = vand.u32 %v1774, 4294901760
    %v1996 = vsub.f32 %v1774, %v1995
    %v1997 = vand.u32 %v1996, 4294901760
    %v1998 = vsub.f32 %v1996, %v1997
    %v1999 = vand.u32 %v1998, 4294901760
    %2000 = vmatprep.subr.mxu0 %v1999
    %v2001 = vand.u32 %v1773, 4294901760
    %v2002 = vsub.f32 %v1773, %v2001
    %v2003 = vand.u32 %v2002, 4294901760
    %v2004 = vsub.f32 %v2002, %v2003
    %v2005 = vand.u32 %v2004, 4294901760
    %2006 = vmatpush1.msra.mxu0 %v2005
    %v2007 = vand.u32 %v1772, 4294901760
    %v2008 = vsub.f32 %v1772, %v2007
    %v2009 = vand.u32 %v2008, 4294901760
    %v2010 = vsub.f32 %v2008, %v2009
    %v2011 = vand.u32 %v2010, 4294901760
    %2012 = vmatprep.subr.mxu0 %v2011
    %v2013 = vand.u32 %v1771, 4294901760
    %v2014 = vsub.f32 %v1771, %v2013
    %v2015 = vand.u32 %v2014, 4294901760
    %v2016 = vsub.f32 %v2014, %v2015
    %v2017 = vand.u32 %v2016, 4294901760
    %2018 = vmatpush1.msra.mxu0 %v2017
    %v2019 = vand.u32 %v1770, 4294901760
    %v2020 = vsub.f32 %v1770, %v2019
    %v2021 = vand.u32 %v2020, 4294901760
    %v2022 = vsub.f32 %v2020, %v2021
    %v2023 = vand.u32 %v2022, 4294901760
    %2024 = vmatprep.subr.mxu0 %v2023
    %v2025 = vand.u32 %v1769, 4294901760
    %v2026 = vsub.f32 %v1769, %v2025
    %v2027 = vand.u32 %v2026, 4294901760
    %v2028 = vsub.f32 %v2026, %v2027
    %v2029 = vand.u32 %v2028, 4294901760
    %2030 = vmatpush1.msra.mxu0 %v2029
    %v2031 = vand.u32 %v1768, 4294901760
    %v2032 = vsub.f32 %v1768, %v2031
    %v2033 = vand.u32 %v2032, 4294901760
    %v2034 = vsub.f32 %v2032, %v2033
    %v2035 = vand.u32 %v2034, 4294901760
    %2036 = vmatprep.subr.mxu0 %v2035
    %v2037 = vand.u32 %v1767, 4294901760
    %v2038 = vsub.f32 %v1767, %v2037
    %v2039 = vand.u32 %v2038, 4294901760
    %v2040 = vsub.f32 %v2038, %v2039
    %v2041 = vand.u32 %v2040, 4294901760
    %2042 = vmatpush1.msra.mxu0 %v2041
    %v2043 = vand.u32 %v1766, 4294901760
    %v2044 = vsub.f32 %v1766, %v2043
    %v2045 = vand.u32 %v2044, 4294901760
    %v2046 = vsub.f32 %v2044, %v2045
    %v2047 = vand.u32 %v2046, 4294901760
    %2048 = vmatprep.subr.mxu0 %v2047
    %v2049 = vand.u32 %v1765, 4294901760
    %v2050 = vsub.f32 %v1765, %v2049
    %v2051 = vand.u32 %v2050, 4294901760
    %v2052 = vsub.f32 %v2050, %v2051
    %v2053 = vand.u32 %v2052, 4294901760
    %2054 = vmatpush1.msra.mxu0 %v2053
    %v2055 = vand.u32 %v1764, 4294901760
    %v2056 = vsub.f32 %v1764, %v2055
    %v2057 = vand.u32 %v2056, 4294901760
    %v2058 = vsub.f32 %v2056, %v2057
    %v2059 = vand.u32 %v2058, 4294901760
    %2060 = vmatprep.subr.mxu0 %v2059
    %v2061 = vand.u32 %v1763, 4294901760
    %v2062 = vsub.f32 %v1763, %v2061
    %v2063 = vand.u32 %v2062, 4294901760
    %v2064 = vsub.f32 %v2062, %v2063
    %v2065 = vand.u32 %v2064, 4294901760
    %2066 = vmatpush1.msra.mxu0 %v2065
    %v2067 = vand.u32 %v1762, 4294901760
    %v2068 = vsub.f32 %v1762, %v2067
    %v2069 = vand.u32 %v2068, 4294901760
    %v2070 = vsub.f32 %v2068, %v2069
    %v2071 = vand.u32 %v2070, 4294901760
    %2072 = vmatprep.subr.mxu0 %v2071
    %v2073 = vand.u32 %v1761, 4294901760
    %v2074 = vsub.f32 %v1761, %v2073
    %v2075 = vand.u32 %v2074, 4294901760
    %v2076 = vsub.f32 %v2074, %v2075
    %v2077 = vand.u32 %v2076, 4294901760
    %2078 = vmatpush1.msra.mxu0 %v2077
    %v2079 = vand.u32 %v1760, 4294901760
    %v2080 = vsub.f32 %v1760, %v2079
    %v2081 = vand.u32 %v2080, 4294901760
    %v2082 = vsub.f32 %v2080, %v2081
    %v2083 = vand.u32 %v2082, 4294901760
    %2084 = vmatprep.subr.mxu0 %v2083
    %v2085 = vand.u32 %v1759, 4294901760
    %v2086 = vsub.f32 %v1759, %v2085
    %v2087 = vand.u32 %v2086, 4294901760
    %v2088 = vsub.f32 %v2086, %v2087
    %v2089 = vand.u32 %v2088, 4294901760
    %2090 = vmatpush1.msra.mxu0 %v2089
    %2091 = vmatprep.subr.mxu0 0.0
    %2092 = vmatpush2.msra.mxu0 0.0
    %2093 = vmatprep.subr.mxu0 0.0
    %2094 = vmatpush2.msra.mxu0 0.0
    %2095 = vmatprep.subr.mxu0 0.0
    %2096 = vmatpush2.msra.mxu0 0.0
    %2097 = vmatprep.subr.mxu0 0.0
    %2098 = vmatpush2.msra.mxu0 0.0
    %2099 = vmatprep.subr.mxu0 0.0
    %2100 = vmatpush2.msra.mxu0 0.0
    %2101 = vmatprep.subr.mxu0 0.0
    %2102 = vmatpush2.msra.mxu0 0.0
    %2103 = vmatprep.subr.mxu0 0.0
    %2104 = vmatpush2.msra.mxu0 0.0
    %2105 = vmatprep.subr.mxu0 0.0
    %2106 = vmatpush2.msra.mxu0 0.0
    %2107 = vmatprep.subr.mxu0 0.0
    %2108 = vmatpush2.msra.mxu0 0.0
    %2109 = vmatprep.subr.mxu0 0.0
    %2110 = vmatpush2.msra.mxu0 0.0
    %2111 = vmatprep.subr.mxu0 0.0
    %2112 = vmatpush2.msra.mxu0 0.0
    %2113 = vmatprep.subr.mxu0 0.0
    %2114 = vmatpush2.msra.mxu0 0.0
    %2115 = vmatprep.subr.mxu0 0.0
    %2116 = vmatpush2.msra.mxu0 0.0
    %2117 = vmatprep.subr.mxu0 0.0
    %2118 = vmatpush2.msra.mxu0 0.0
    %2119 = vmatprep.subr.mxu0 0.0
    %2120 = vmatpush2.msra.mxu0 0.0
    %2121 = vmatprep.subr.mxu0 0.0
    %2122 = vmatpush2.msra.mxu0 0.0
    %2123 = vmatprep.mubr.f32.mxu0 0.0
    %v2124 = vand.u32 %v1758, 4294901760
    %2125 = vmatmul.mubr.f32.gmra.mxu0 %v2124
    %v2126 = vpop.f32.mrf.mxu0
    %v2127 = vadd.f32 %v1895, %v2126
    %v2128 = vpop.f32.mrf.mxu0
    %v2129 = vadd.f32 %v1897, %v2128
    %2130 = vdwg.mxu0
    %v2131 = vand.u32 %v1790, 4294901760
    %v2132 = vsub.f32 %v1790, %v2131
    %2133 = vmatprep.subr.mxu0 %v2132
    %v2134 = vand.u32 %v1789, 4294901760
    %v2135 = vsub.f32 %v1789, %v2134
    %2136 = vmatpush1.msra.mxu0 %v2135
    %v2137 = vand.u32 %v1788, 4294901760
    %v2138 = vsub.f32 %v1788, %v2137
    %2139 = vmatprep.subr.mxu0 %v2138
    %v2140 = vand.u32 %v1787, 4294901760
    %v2141 = vsub.f32 %v1787, %v2140
    %2142 = vmatpush1.msra.mxu0 %v2141
    %v2143 = vand.u32 %v1786, 4294901760
    %v2144 = vsub.f32 %v1786, %v2143
    %2145 = vmatprep.subr.mxu0 %v2144
    %v2146 = vand.u32 %v1785, 4294901760
    %v2147 = vsub.f32 %v1785, %v2146
    %2148 = vmatpush1.msra.mxu0 %v2147
    %v2149 = vand.u32 %v1784, 4294901760
    %v2150 = vsub.f32 %v1784, %v2149
    %2151 = vmatprep.subr.mxu0 %v2150
    %v2152 = vand.u32 %v1783, 4294901760
    %v2153 = vsub.f32 %v1783, %v2152
    %2154 = vmatpush1.msra.mxu0 %v2153
    %v2155 = vand.u32 %v1782, 4294901760
    %v2156 = vsub.f32 %v1782, %v2155
    %2157 = vmatprep.subr.mxu0 %v2156
    %v2158 = vand.u32 %v1781, 4294901760
    %v2159 = vsub.f32 %v1781, %v2158
    %2160 = vmatpush1.msra.mxu0 %v2159
    %v2161 = vand.u32 %v1780, 4294901760
    %v2162 = vsub.f32 %v1780, %v2161
    %2163 = vmatprep.subr.mxu0 %v2162
    %v2164 = vand.u32 %v1779, 4294901760
    %v2165 = vsub.f32 %v1779, %v2164
    %2166 = vmatpush1.msra.mxu0 %v2165
    %v2167 = vand.u32 %v1778, 4294901760
    %v2168 = vsub.f32 %v1778, %v2167
    %2169 = vmatprep.subr.mxu0 %v2168
    %v2170 = vand.u32 %v1777, 4294901760
    %v2171 = vsub.f32 %v1777, %v2170
    %2172 = vmatpush1.msra.mxu0 %v2171
    %v2173 = vand.u32 %v1776, 4294901760
    %v2174 = vsub.f32 %v1776, %v2173
    %2175 = vmatprep.subr.mxu0 %v2174
    %v2176 = vand.u32 %v1775, 4294901760
    %v2177 = vsub.f32 %v1775, %v2176
    %2178 = vmatpush1.msra.mxu0 %v2177
    %v2179 = vand.u32 %v1774, 4294901760
    %v2180 = vsub.f32 %v1774, %v2179
    %2181 = vmatprep.subr.mxu0 %v2180
    %v2182 = vand.u32 %v1773, 4294901760
    %v2183 = vsub.f32 %v1773, %v2182
    %2184 = vmatpush1.msra.mxu0 %v2183
    %v2185 = vand.u32 %v1772, 4294901760
    %v2186 = vsub.f32 %v1772, %v2185
    %2187 = vmatprep.subr.mxu0 %v2186
    %v2188 = vand.u32 %v1771, 4294901760
    %v2189 = vsub.f32 %v1771, %v2188
    %2190 = vmatpush1.msra.mxu0 %v2189
    %v2191 = vand.u32 %v1770, 4294901760
    %v2192 = vsub.f32 %v1770, %v2191
    %2193 = vmatprep.subr.mxu0 %v2192
    %v2194 = vand.u32 %v1769, 4294901760
    %v2195 = vsub.f32 %v1769, %v2194
    %2196 = vmatpush1.msra.mxu0 %v2195
    %v2197 = vand.u32 %v1768, 4294901760
    %v2198 = vsub.f32 %v1768, %v2197
    %2199 = vmatprep.subr.mxu0 %v2198
    %v2200 = vand.u32 %v1767, 4294901760
    %v2201 = vsub.f32 %v1767, %v2200
    %2202 = vmatpush1.msra.mxu0 %v2201
    %v2203 = vand.u32 %v1766, 4294901760
    %v2204 = vsub.f32 %v1766, %v2203
    %2205 = vmatprep.subr.mxu0 %v2204
    %v2206 = vand.u32 %v1765, 4294901760
    %v2207 = vsub.f32 %v1765, %v2206
    %2208 = vmatpush1.msra.mxu0 %v2207
    %v2209 = vand.u32 %v1764, 4294901760
    %v2210 = vsub.f32 %v1764, %v2209
    %2211 = vmatprep.subr.mxu0 %v2210
    %v2212 = vand.u32 %v1763, 4294901760
    %v2213 = vsub.f32 %v1763, %v2212
    %2214 = vmatpush1.msra.mxu0 %v2213
    %v2215 = vand.u32 %v1762, 4294901760
    %v2216 = vsub.f32 %v1762, %v2215
    %2217 = vmatprep.subr.mxu0 %v2216
    %v2218 = vand.u32 %v1761, 4294901760
    %v2219 = vsub.f32 %v1761, %v2218
    %2220 = vmatpush1.msra.mxu0 %v2219
    %v2221 = vand.u32 %v1760, 4294901760
    %v2222 = vsub.f32 %v1760, %v2221
    %2223 = vmatprep.subr.mxu0 %v2222
    %v2224 = vand.u32 %v1759, 4294901760
    %v2225 = vsub.f32 %v1759, %v2224
    %2226 = vmatpush1.msra.mxu0 %v2225
    %2227 = vmatprep.subr.mxu0 0.0
    %2228 = vmatpush2.msra.mxu0 0.0
    %2229 = vmatprep.subr.mxu0 0.0
    %2230 = vmatpush2.msra.mxu0 0.0
    %2231 = vmatprep.subr.mxu0 0.0
    %2232 = vmatpush2.msra.mxu0 0.0
    %2233 = vmatprep.subr.mxu0 0.0
    %2234 = vmatpush2.msra.mxu0 0.0
    %2235 = vmatprep.subr.mxu0 0.0
    %2236 = vmatpush2.msra.mxu0 0.0
    %2237 = vmatprep.subr.mxu0 0.0
    %2238 = vmatpush2.msra.mxu0 0.0
    %2239 = vmatprep.subr.mxu0 0.0
    %2240 = vmatpush2.msra.mxu0 0.0
    %2241 = vmatprep.subr.mxu0 0.0
    %2242 = vmatpush2.msra.mxu0 0.0
    %2243 = vmatprep.subr.mxu0 0.0
    %2244 = vmatpush2.msra.mxu0 0.0
    %2245 = vmatprep.subr.mxu0 0.0
    %2246 = vmatpush2.msra.mxu0 0.0
    %2247 = vmatprep.subr.mxu0 0.0
    %2248 = vmatpush2.msra.mxu0 0.0
    %2249 = vmatprep.subr.mxu0 0.0
    %2250 = vmatpush2.msra.mxu0 0.0
    %2251 = vmatprep.subr.mxu0 0.0
    %2252 = vmatpush2.msra.mxu0 0.0
    %2253 = vmatprep.subr.mxu0 0.0
    %2254 = vmatpush2.msra.mxu0 0.0
    %2255 = vmatprep.subr.mxu0 0.0
    %2256 = vmatpush2.msra.mxu0 0.0
    %2257 = vmatprep.subr.mxu0 0.0
    %2258 = vmatpush2.msra.mxu0 0.0
    %2259 = vmatprep.mubr.f32.mxu0 0.0
    %v2260 = vand.u32 %v1758, 4294901760
    %v2261 = vsub.f32 %v1758, %v2260
    %2262 = vmatmul.mubr.f32.gmra.mxu0 %v2261
    %v2263 = vpop.f32.mrf.mxu0
    %v2264 = vadd.f32 %v2127, %v2263
    %v2265 = vpop.f32.mrf.mxu0
    %v2266 = vadd.f32 %v2129, %v2265
    %2267 = vdwg.mxu0
    %v2268 = vand.u32 %v1790, 4294901760
    %2269 = vmatprep.subr.mxu0 %v2268
    %v2270 = vand.u32 %v1789, 4294901760
    %2271 = vmatpush1.msra.mxu0 %v2270
    %v2272 = vand.u32 %v1788, 4294901760
    %2273 = vmatprep.subr.mxu0 %v2272
    %v2274 = vand.u32 %v1787, 4294901760
    %2275 = vmatpush1.msra.mxu0 %v2274
    %v2276 = vand.u32 %v1786, 4294901760
    %2277 = vmatprep.subr.mxu0 %v2276
    %v2278 = vand.u32 %v1785, 4294901760
    %2279 = vmatpush1.msra.mxu0 %v2278
    %v2280 = vand.u32 %v1784, 4294901760
    %2281 = vmatprep.subr.mxu0 %v2280
    %v2282 = vand.u32 %v1783, 4294901760
    %2283 = vmatpush1.msra.mxu0 %v2282
    %v2284 = vand.u32 %v1782, 4294901760
    %2285 = vmatprep.subr.mxu0 %v2284
    %v2286 = vand.u32 %v1781, 4294901760
    %2287 = vmatpush1.msra.mxu0 %v2286
    %v2288 = vand.u32 %v1780, 4294901760
    %2289 = vmatprep.subr.mxu0 %v2288
    %v2290 = vand.u32 %v1779, 4294901760
    %2291 = vmatpush1.msra.mxu0 %v2290
    %v2292 = vand.u32 %v1778, 4294901760
    %2293 = vmatprep.subr.mxu0 %v2292
    %v2294 = vand.u32 %v1777, 4294901760
    %2295 = vmatpush1.msra.mxu0 %v2294
    %v2296 = vand.u32 %v1776, 4294901760
    %2297 = vmatprep.subr.mxu0 %v2296
    %v2298 = vand.u32 %v1775, 4294901760
    %2299 = vmatpush1.msra.mxu0 %v2298
    %v2300 = vand.u32 %v1774, 4294901760
    %2301 = vmatprep.subr.mxu0 %v2300
    %v2302 = vand.u32 %v1773, 4294901760
    %2303 = vmatpush1.msra.mxu0 %v2302
    %v2304 = vand.u32 %v1772, 4294901760
    %2305 = vmatprep.subr.mxu0 %v2304
    %v2306 = vand.u32 %v1771, 4294901760
    %2307 = vmatpush1.msra.mxu0 %v2306
    %v2308 = vand.u32 %v1770, 4294901760
    %2309 = vmatprep.subr.mxu0 %v2308
    %v2310 = vand.u32 %v1769, 4294901760
    %2311 = vmatpush1.msra.mxu0 %v2310
    %v2312 = vand.u32 %v1768, 4294901760
    %2313 = vmatprep.subr.mxu0 %v2312
    %v2314 = vand.u32 %v1767, 4294901760
    %2315 = vmatpush1.msra.mxu0 %v2314
    %v2316 = vand.u32 %v1766, 4294901760
    %2317 = vmatprep.subr.mxu0 %v2316
    %v2318 = vand.u32 %v1765, 4294901760
    %2319 = vmatpush1.msra.mxu0 %v2318
    %v2320 = vand.u32 %v1764, 4294901760
    %2321 = vmatprep.subr.mxu0 %v2320
    %v2322 = vand.u32 %v1763, 4294901760
    %2323 = vmatpush1.msra.mxu0 %v2322
    %v2324 = vand.u32 %v1762, 4294901760
    %2325 = vmatprep.subr.mxu0 %v2324
    %v2326 = vand.u32 %v1761, 4294901760
    %2327 = vmatpush1.msra.mxu0 %v2326
    %v2328 = vand.u32 %v1760, 4294901760
    %2329 = vmatprep.subr.mxu0 %v2328
    %v2330 = vand.u32 %v1759, 4294901760
    %2331 = vmatpush1.msra.mxu0 %v2330
    %2332 = vmatprep.subr.mxu0 0.0
    %2333 = vmatpush2.msra.mxu0 0.0
    %2334 = vmatprep.subr.mxu0 0.0
    %2335 = vmatpush2.msra.mxu0 0.0
    %2336 = vmatprep.subr.mxu0 0.0
    %2337 = vmatpush2.msra.mxu0 0.0
    %2338 = vmatprep.subr.mxu0 0.0
    %2339 = vmatpush2.msra.mxu0 0.0
    %2340 = vmatprep.subr.mxu0 0.0
    %2341 = vmatpush2.msra.mxu0 0.0
    %2342 = vmatprep.subr.mxu0 0.0
    %2343 = vmatpush2.msra.mxu0 0.0
    %2344 = vmatprep.subr.mxu0 0.0
    %2345 = vmatpush2.msra.mxu0 0.0
    %2346 = vmatprep.subr.mxu0 0.0
    %2347 = vmatpush2.msra.mxu0 0.0
    %2348 = vmatprep.subr.mxu0 0.0
    %2349 = vmatpush2.msra.mxu0 0.0
    %2350 = vmatprep.subr.mxu0 0.0
    %2351 = vmatpush2.msra.mxu0 0.0
    %2352 = vmatprep.subr.mxu0 0.0
    %2353 = vmatpush2.msra.mxu0 0.0
    %2354 = vmatprep.subr.mxu0 0.0
    %2355 = vmatpush2.msra.mxu0 0.0
    %2356 = vmatprep.subr.mxu0 0.0
    %2357 = vmatpush2.msra.mxu0 0.0
    %2358 = vmatprep.subr.mxu0 0.0
    %2359 = vmatpush2.msra.mxu0 0.0
    %2360 = vmatprep.subr.mxu0 0.0
    %2361 = vmatpush2.msra.mxu0 0.0
    %2362 = vmatprep.subr.mxu0 0.0
    %2363 = vmatpush2.msra.mxu0 0.0
    %2364 = vmatprep.mubr.f32.mxu0 0.0
    %v2365 = vand.u32 %v1758, 4294901760
    %v2366 = vsub.f32 %v1758, %v2365
    %v2367 = vand.u32 %v2366, 4294901760
    %2368 = vmatmul.mubr.f32.gmra.mxu0 %v2367
    %v2369 = vpop.f32.mrf.mxu0
    %v2370 = vadd.f32 %v2264, %v2369
    %v2371 = vpop.f32.mrf.mxu0
    %v2372 = vadd.f32 %v2266, %v2371
    %2373 = vdwg.mxu0
    %v2374 = vand.u32 %v1790, 4294901760
    %v2375 = vsub.f32 %v1790, %v2374
    %v2376 = vand.u32 %v2375, 4294901760
    %2377 = vmatprep.subr.mxu0 %v2376
    %v2378 = vand.u32 %v1789, 4294901760
    %v2379 = vsub.f32 %v1789, %v2378
    %v2380 = vand.u32 %v2379, 4294901760
    %2381 = vmatpush1.msra.mxu0 %v2380
    %v2382 = vand.u32 %v1788, 4294901760
    %v2383 = vsub.f32 %v1788, %v2382
    %v2384 = vand.u32 %v2383, 4294901760
    %2385 = vmatprep.subr.mxu0 %v2384
    %v2386 = vand.u32 %v1787, 4294901760
    %v2387 = vsub.f32 %v1787, %v2386
    %v2388 = vand.u32 %v2387, 4294901760
    %2389 = vmatpush1.msra.mxu0 %v2388
    %v2390 = vand.u32 %v1786, 4294901760
    %v2391 = vsub.f32 %v1786, %v2390
    %v2392 = vand.u32 %v2391, 4294901760
    %2393 = vmatprep.subr.mxu0 %v2392
    %v2394 = vand.u32 %v1785, 4294901760
    %v2395 = vsub.f32 %v1785, %v2394
    %v2396 = vand.u32 %v2395, 4294901760
    %2397 = vmatpush1.msra.mxu0 %v2396
    %v2398 = vand.u32 %v1784, 4294901760
    %v2399 = vsub.f32 %v1784, %v2398
    %v2400 = vand.u32 %v2399, 4294901760
    %2401 = vmatprep.subr.mxu0 %v2400
    %v2402 = vand.u32 %v1783, 4294901760
    %v2403 = vsub.f32 %v1783, %v2402
    %v2404 = vand.u32 %v2403, 4294901760
    %2405 = vmatpush1.msra.mxu0 %v2404
    %v2406 = vand.u32 %v1782, 4294901760
    %v2407 = vsub.f32 %v1782, %v2406
    %v2408 = vand.u32 %v2407, 4294901760
    %2409 = vmatprep.subr.mxu0 %v2408
    %v2410 = vand.u32 %v1781, 4294901760
    %v2411 = vsub.f32 %v1781, %v2410
    %v2412 = vand.u32 %v2411, 4294901760
    %2413 = vmatpush1.msra.mxu0 %v2412
    %v2414 = vand.u32 %v1780, 4294901760
    %v2415 = vsub.f32 %v1780, %v2414
    %v2416 = vand.u32 %v2415, 4294901760
    %2417 = vmatprep.subr.mxu0 %v2416
    %v2418 = vand.u32 %v1779, 4294901760
    %v2419 = vsub.f32 %v1779, %v2418
    %v2420 = vand.u32 %v2419, 4294901760
    %2421 = vmatpush1.msra.mxu0 %v2420
    %v2422 = vand.u32 %v1778, 4294901760
    %v2423 = vsub.f32 %v1778, %v2422
    %v2424 = vand.u32 %v2423, 4294901760
    %2425 = vmatprep.subr.mxu0 %v2424
    %v2426 = vand.u32 %v1777, 4294901760
    %v2427 = vsub.f32 %v1777, %v2426
    %v2428 = vand.u32 %v2427, 4294901760
    %2429 = vmatpush1.msra.mxu0 %v2428
    %v2430 = vand.u32 %v1776, 4294901760
    %v2431 = vsub.f32 %v1776, %v2430
    %v2432 = vand.u32 %v2431, 4294901760
    %2433 = vmatprep.subr.mxu0 %v2432
    %v2434 = vand.u32 %v1775, 4294901760
    %v2435 = vsub.f32 %v1775, %v2434
    %v2436 = vand.u32 %v2435, 4294901760
    %2437 = vmatpush1.msra.mxu0 %v2436
    %v2438 = vand.u32 %v1774, 4294901760
    %v2439 = vsub.f32 %v1774, %v2438
    %v2440 = vand.u32 %v2439, 4294901760
    %2441 = vmatprep.subr.mxu0 %v2440
    %v2442 = vand.u32 %v1773, 4294901760
    %v2443 = vsub.f32 %v1773, %v2442
    %v2444 = vand.u32 %v2443, 4294901760
    %2445 = vmatpush1.msra.mxu0 %v2444
    %v2446 = vand.u32 %v1772, 4294901760
    %v2447 = vsub.f32 %v1772, %v2446
    %v2448 = vand.u32 %v2447, 4294901760
    %2449 = vmatprep.subr.mxu0 %v2448
    %v2450 = vand.u32 %v1771, 4294901760
    %v2451 = vsub.f32 %v1771, %v2450
    %v2452 = vand.u32 %v2451, 4294901760
    %2453 = vmatpush1.msra.mxu0 %v2452
    %v2454 = vand.u32 %v1770, 4294901760
    %v2455 = vsub.f32 %v1770, %v2454
    %v2456 = vand.u32 %v2455, 4294901760
    %2457 = vmatprep.subr.mxu0 %v2456
    %v2458 = vand.u32 %v1769, 4294901760
    %v2459 = vsub.f32 %v1769, %v2458
    %v2460 = vand.u32 %v2459, 4294901760
    %2461 = vmatpush1.msra.mxu0 %v2460
    %v2462 = vand.u32 %v1768, 4294901760
    %v2463 = vsub.f32 %v1768, %v2462
    %v2464 = vand.u32 %v2463, 4294901760
    %2465 = vmatprep.subr.mxu0 %v2464
    %v2466 = vand.u32 %v1767, 4294901760
    %v2467 = vsub.f32 %v1767, %v2466
    %v2468 = vand.u32 %v2467, 4294901760
    %2469 = vmatpush1.msra.mxu0 %v2468
    %v2470 = vand.u32 %v1766, 4294901760
    %v2471 = vsub.f32 %v1766, %v2470
    %v2472 = vand.u32 %v2471, 4294901760
    %2473 = vmatprep.subr.mxu0 %v2472
    %v2474 = vand.u32 %v1765, 4294901760
    %v2475 = vsub.f32 %v1765, %v2474
    %v2476 = vand.u32 %v2475, 4294901760
    %2477 = vmatpush1.msra.mxu0 %v2476
    %v2478 = vand.u32 %v1764, 4294901760
    %v2479 = vsub.f32 %v1764, %v2478
    %v2480 = vand.u32 %v2479, 4294901760
    %2481 = vmatprep.subr.mxu0 %v2480
    %v2482 = vand.u32 %v1763, 4294901760
    %v2483 = vsub.f32 %v1763, %v2482
    %v2484 = vand.u32 %v2483, 4294901760
    %2485 = vmatpush1.msra.mxu0 %v2484
    %v2486 = vand.u32 %v1762, 4294901760
    %v2487 = vsub.f32 %v1762, %v2486
    %v2488 = vand.u32 %v2487, 4294901760
    %2489 = vmatprep.subr.mxu0 %v2488
    %v2490 = vand.u32 %v1761, 4294901760
    %v2491 = vsub.f32 %v1761, %v2490
    %v2492 = vand.u32 %v2491, 4294901760
    %2493 = vmatpush1.msra.mxu0 %v2492
    %v2494 = vand.u32 %v1760, 4294901760
    %v2495 = vsub.f32 %v1760, %v2494
    %v2496 = vand.u32 %v2495, 4294901760
    %2497 = vmatprep.subr.mxu0 %v2496
    %v2498 = vand.u32 %v1759, 4294901760
    %v2499 = vsub.f32 %v1759, %v2498
    %v2500 = vand.u32 %v2499, 4294901760
    %2501 = vmatpush1.msra.mxu0 %v2500
    %2502 = vmatprep.subr.mxu0 0.0
    %2503 = vmatpush2.msra.mxu0 0.0
    %2504 = vmatprep.subr.mxu0 0.0
    %2505 = vmatpush2.msra.mxu0 0.0
    %2506 = vmatprep.subr.mxu0 0.0
    %2507 = vmatpush2.msra.mxu0 0.0
    %2508 = vmatprep.subr.mxu0 0.0
    %2509 = vmatpush2.msra.mxu0 0.0
    %2510 = vmatprep.subr.mxu0 0.0
    %2511 = vmatpush2.msra.mxu0 0.0
    %2512 = vmatprep.subr.mxu0 0.0
    %2513 = vmatpush2.msra.mxu0 0.0
    %2514 = vmatprep.subr.mxu0 0.0
    %2515 = vmatpush2.msra.mxu0 0.0
    %2516 = vmatprep.subr.mxu0 0.0
    %2517 = vmatpush2.msra.mxu0 0.0
    %2518 = vmatprep.subr.mxu0 0.0
    %2519 = vmatpush2.msra.mxu0 0.0
    %2520 = vmatprep.subr.mxu0 0.0
    %2521 = vmatpush2.msra.mxu0 0.0
    %2522 = vmatprep.subr.mxu0 0.0
    %2523 = vmatpush2.msra.mxu0 0.0
    %2524 = vmatprep.subr.mxu0 0.0
    %2525 = vmatpush2.msra.mxu0 0.0
    %2526 = vmatprep.subr.mxu0 0.0
    %2527 = vmatpush2.msra.mxu0 0.0
    %2528 = vmatprep.subr.mxu0 0.0
    %2529 = vmatpush2.msra.mxu0 0.0
    %2530 = vmatprep.subr.mxu0 0.0
    %2531 = vmatpush2.msra.mxu0 0.0
    %2532 = vmatprep.subr.mxu0 0.0
    %2533 = vmatpush2.msra.mxu0 0.0
    %2534 = vmatprep.mubr.f32.mxu0 0.0
    %v2535 = vand.u32 %v1758, 4294901760
    %2536 = vmatmul.mubr.f32.gmra.mxu0 %v2535
    %v2537 = vpop.f32.mrf.mxu0
    %v2538 = vadd.f32 %v2370, %v2537
    %v2539 = vpop.f32.mrf.mxu0
    %v2540 = vadd.f32 %v2372, %v2539
    %2541 = vdwg.mxu0
    %v2542 = vand.u32 %v1790, 4294901760
    %2543 = vmatprep.subr.mxu0 %v2542
    %v2544 = vand.u32 %v1789, 4294901760
    %2545 = vmatpush1.msra.mxu0 %v2544
    %v2546 = vand.u32 %v1788, 4294901760
    %2547 = vmatprep.subr.mxu0 %v2546
    %v2548 = vand.u32 %v1787, 4294901760
    %2549 = vmatpush1.msra.mxu0 %v2548
    %v2550 = vand.u32 %v1786, 4294901760
    %2551 = vmatprep.subr.mxu0 %v2550
    %v2552 = vand.u32 %v1785, 4294901760
    %2553 = vmatpush1.msra.mxu0 %v2552
    %v2554 = vand.u32 %v1784, 4294901760
    %2555 = vmatprep.subr.mxu0 %v2554
    %v2556 = vand.u32 %v1783, 4294901760
    %2557 = vmatpush1.msra.mxu0 %v2556
    %v2558 = vand.u32 %v1782, 4294901760
    %2559 = vmatprep.subr.mxu0 %v2558
    %v2560 = vand.u32 %v1781, 4294901760
    %2561 = vmatpush1.msra.mxu0 %v2560
    %v2562 = vand.u32 %v1780, 4294901760
    %2563 = vmatprep.subr.mxu0 %v2562
    %v2564 = vand.u32 %v1779, 4294901760
    %2565 = vmatpush1.msra.mxu0 %v2564
    %v2566 = vand.u32 %v1778, 4294901760
    %2567 = vmatprep.subr.mxu0 %v2566
    %v2568 = vand.u32 %v1777, 4294901760
    %2569 = vmatpush1.msra.mxu0 %v2568
    %v2570 = vand.u32 %v1776, 4294901760
    %2571 = vmatprep.subr.mxu0 %v2570
    %v2572 = vand.u32 %v1775, 4294901760
    %2573 = vmatpush1.msra.mxu0 %v2572
    %v2574 = vand.u32 %v1774, 4294901760
    %2575 = vmatprep.subr.mxu0 %v2574
    %v2576 = vand.u32 %v1773, 4294901760
    %2577 = vmatpush1.msra.mxu0 %v2576
    %v2578 = vand.u32 %v1772, 4294901760
    %2579 = vmatprep.subr.mxu0 %v2578
    %v2580 = vand.u32 %v1771, 4294901760
    %2581 = vmatpush1.msra.mxu0 %v2580
    %v2582 = vand.u32 %v1770, 4294901760
    %2583 = vmatprep.subr.mxu0 %v2582
    %v2584 = vand.u32 %v1769, 4294901760
    %2585 = vmatpush1.msra.mxu0 %v2584
    %v2586 = vand.u32 %v1768, 4294901760
    %2587 = vmatprep.subr.mxu0 %v2586
    %v2588 = vand.u32 %v1767, 4294901760
    %2589 = vmatpush1.msra.mxu0 %v2588
    %v2590 = vand.u32 %v1766, 4294901760
    %2591 = vmatprep.subr.mxu0 %v2590
    %v2592 = vand.u32 %v1765, 4294901760
    %2593 = vmatpush1.msra.mxu0 %v2592
    %v2594 = vand.u32 %v1764, 4294901760
    %2595 = vmatprep.subr.mxu0 %v2594
    %v2596 = vand.u32 %v1763, 4294901760
    %2597 = vmatpush1.msra.mxu0 %v2596
    %v2598 = vand.u32 %v1762, 4294901760
    %2599 = vmatprep.subr.mxu0 %v2598
    %v2600 = vand.u32 %v1761, 4294901760
    %2601 = vmatpush1.msra.mxu0 %v2600
    %v2602 = vand.u32 %v1760, 4294901760
    %2603 = vmatprep.subr.mxu0 %v2602
    %v2604 = vand.u32 %v1759, 4294901760
    %2605 = vmatpush1.msra.mxu0 %v2604
    %2606 = vmatprep.subr.mxu0 0.0
    %2607 = vmatpush2.msra.mxu0 0.0
    %2608 = vmatprep.subr.mxu0 0.0
    %2609 = vmatpush2.msra.mxu0 0.0
    %2610 = vmatprep.subr.mxu0 0.0
    %2611 = vmatpush2.msra.mxu0 0.0
    %2612 = vmatprep.subr.mxu0 0.0
    %2613 = vmatpush2.msra.mxu0 0.0
    %2614 = vmatprep.subr.mxu0 0.0
    %2615 = vmatpush2.msra.mxu0 0.0
    %2616 = vmatprep.subr.mxu0 0.0
    %2617 = vmatpush2.msra.mxu0 0.0
    %2618 = vmatprep.subr.mxu0 0.0
    %2619 = vmatpush2.msra.mxu0 0.0
    %2620 = vmatprep.subr.mxu0 0.0
    %2621 = vmatpush2.msra.mxu0 0.0
    %2622 = vmatprep.subr.mxu0 0.0
    %2623 = vmatpush2.msra.mxu0 0.0
    %2624 = vmatprep.subr.mxu0 0.0
    %2625 = vmatpush2.msra.mxu0 0.0
    %2626 = vmatprep.subr.mxu0 0.0
    %2627 = vmatpush2.msra.mxu0 0.0
    %2628 = vmatprep.subr.mxu0 0.0
    %2629 = vmatpush2.msra.mxu0 0.0
    %2630 = vmatprep.subr.mxu0 0.0
    %2631 = vmatpush2.msra.mxu0 0.0
    %2632 = vmatprep.subr.mxu0 0.0
    %2633 = vmatpush2.msra.mxu0 0.0
    %2634 = vmatprep.subr.mxu0 0.0
    %2635 = vmatpush2.msra.mxu0 0.0
    %2636 = vmatprep.subr.mxu0 0.0
    %2637 = vmatpush2.msra.mxu0 0.0
    %2638 = vmatprep.mubr.f32.mxu0 0.0
    %v2639 = vand.u32 %v1758, 4294901760
    %2640 = vmatmul.mubr.f32.gmra.mxu0 %v2639
    %v2641 = vpop.f32.mrf.mxu0
    %v2642 = vadd.f32 %v2538, %v2641
    %v2643 = vpop.f32.mrf.mxu0
    %v2644 = vadd.f32 %v2540, %v2643
    %2645 = vdwg.mxu0
    %2646 = vst [vmem:[#allocation12] sm:$0x1] %v2642
    %v2647 = vld [vmem:[%s7] sm:$0x1]
    %vm2648 = vcmp.gt.f32.partialorder %v2647, 0.0
    %v2649 = vmul.f32 %v1758, 0.0001
    %2651 = vset.pattern.permute.xlu0 1
    %2652 = vperm.xlu0 %2651, %v2649
    %v2653 = vpop.permute.xlu0 %2652
    %v2655 = vlaneseq
    %v2656 = vshrl.u32 %v2655, 7
    %v2657 = vsub.s32 0, %v2656
    %v2658 = vrot.slane %v2653, %v2657
    %v2659 = vsel %vm2648, %v2644, %v2658
    %vm2660 = vcmp.eq.s32.totalorder %v92, 1
    %vm2661 = vcmp.eq.s32.totalorder %v92, 2
    %vm2662 = vmor %vm2660, %vm2661
    %v2663 = vsel %vm2662, 1e-10, %v2659
    %v2664 = vmax.f32 %v2663, 1e-10
    %v2665 = vlog2.pop %v2664
    %v2666 = vmul.f32 %v2665, 0.6931472
    %2667 = vst [vmem:[#allocation14] sm:$0x1] %v2666
    // Predicated region
    $region50: #{word_step.1} parent=1 // pred_check
      _
    $region51: #{word_step.1} parent=1 // pred_check_branch
      %2669 = sbr.rel (0) target = $region53
    $region52: #{word_step.1} parent=1 // pred_region
      %s2671 = ssub.s32 16, 16
      %2672 = vsyncadd [#allocation5], %s2671
      %s2674 = sshll.u32 [#allocation11], 4
      %s2675 = int_to_ptr.vmem [resolvable:$true] %s2674
      %2677 = dma.vmem_to_hbm [thread:$0]  %s2675, 16, %s8, [#allocation5]
    $region53: #{word_step.1} parent=1 // pred_fallthru
      _
    // Predicated region
    $region54: #{word_step.1} parent=1 // pred_check
      _
    $region55: #{word_step.1} parent=1 // pred_check_branch
      %2679 = sbr.rel (0) target = $region57
    $region56: #{word_step.1} parent=1 // pred_region
      %s2681 = ssub.s32 16, 16
      %2682 = vsyncadd [#allocation13], %s2681
      %s2684 = sshll.u32 [#allocation12], 4
      %s2685 = int_to_ptr.vmem [resolvable:$true] %s2684
      %2687 = dma.vmem_to_hbm [thread:$0]  %s2685, 16, %s9, [#allocation13]
    $region57: #{word_step.1} parent=1 // pred_fallthru
      _
    // Predicated region
    $region58: #{word_step.1} parent=1 // pred_check
      _
    $region59: #{word_step.1} parent=1 // pred_check_branch
      %2689 = sbr.rel (0) target = $region61
    $region60: #{word_step.1} parent=1 // pred_region
      %s2691 = ssub.s32 16, 16
      %2692 = vsyncadd [#allocation13], %s2691
      %s2694 = sshll.u32 [#allocation14], 4
      %s2695 = int_to_ptr.vmem [resolvable:$true] %s2694
      %2697 = dma.vmem_to_hbm [thread:$0]  %s2695, 16, %s10, [#allocation13]
    $region61: #{word_step.1} parent=1 // pred_fallthru
      _
    // Predicated region
    $region62: #{word_step.1} parent=1 // pred_check
      _
    $region63: #{word_step.1} parent=1 // pred_check_branch
      %2699 = sbr.rel (0) target = $region65
    $region64: #{word_step.1} parent=1 // pred_region
      %2700 = dma.done [#allocation5], 16
    $region65: #{word_step.1} parent=1 // pred_fallthru
      _
    // Predicated region
    $region66: #{word_step.1} parent=1 // pred_check
      _
    $region67: #{word_step.1} parent=1 // pred_check_branch
      %2702 = sbr.rel (0) target = $region69
    $region68: #{word_step.1} parent=1 // pred_region
      %2703 = dma.done [#allocation13], 16
    $region69: #{word_step.1} parent=1 // pred_fallthru
      _
    // Predicated region
    $region70: #{word_step.1} parent=1 // pred_check
      _
    $region71: #{word_step.1} parent=1 // pred_check_branch
      %2705 = sbr.rel (0) target = $region73
    $region72: #{word_step.1} parent=1 // pred_region
      %2706 = dma.done [#allocation13], 16
    $region73: #{word_step.1} parent=1 // pred_fallthru
      _
    %2707 = vsyncpa [#allocation4], 1
    %2708 = vsyncpa [#allocation7], 1
    %2709 = vsyncpa [#allocation10], 1
    %2710 = vsyncpa [#allocation5], 1
    %2711 = vsyncpa [#allocation13], 1

</llo_original>
